<compile_context>
chip_gen: v7x
topology: tpu7x:2x2x1
jax: 0.10.0
libtpu: 0.0.40
codegen_flags: <defaults>
</compile_context>

<pallas_src>
import jax
import jax.numpy as jnp
from jax import lax
from jax.experimental import pallas as pl
from jax.experimental.pallas import tpu as pltpu

# Small, module-consistent shapes.
N, CIN, H, W = 2, 3, 16, 16
COUT, KH, KW = 64, 3, 3
EPS = 1e-5  # nn.BatchNorm2d default eps

NHW = N * H * W                 # 512 rows (multiple of 8 sublanes)
KRAW = KH * KW * CIN            # 27
KPAD = 32                       # contraction dim padded 27 -> 32 (was 128)
CHUNK = 128                     # rows per stats / normalize sweep chunk


def conv_bn_kernel(p_ref, w_ref, gb_ref, o_ref):
    """Single grid step over the whole (small) problem.

    p_ref:  (NHW, KPAD)  bf16 im2col patch matrix (zero-padded K)      [VMEM]
    w_ref:  (KPAD, COUT) bf16 flattened conv weights (zero-padded K)   [VMEM]
    gb_ref: (2, COUT)    f32, row 0 = BN gamma, row 1 = BN beta        [VMEM]
    o_ref:  (NHW, COUT)  f32 conv+BN output; also used as acc scratch  [VMEM]
    """
    # --- convolution: one im2col matmul on the MXU (bf16 in, f32 acc) ---
    # Result goes straight to the (VMEM-resident) output tile: a (512,64) f32
    # acc is the whole register file, so it spills regardless.
    o_ref[...] = jnp.dot(p_ref[...], w_ref[...],
                         preferred_element_type=jnp.float32)

    # --- BatchNorm2d (training mode): fused single sweep for sum & sum^2 ---
    inv_n = 1.0 / NHW
    n_chunks = NHW // CHUNK

    def stats_body(c, carry):
        s, s2 = carry
        r = pl.multiple_of(c * CHUNK, CHUNK)
        blk = o_ref[pl.ds(r, CHUNK), :]                       # (CHUNK, COUT)
        s = s + jnp.sum(blk, axis=0, keepdims=True)
        s2 = s2 + jnp.sum(blk * blk, axis=0, keepdims=True)
        return s, s2

    zero = jnp.zeros((1, COUT), jnp.float32)
    s, s2 = lax.fori_loop(0, n_chunks, stats_body, (zero, zero), unroll=True)

    mean = s * inv_n                                          # (1, COUT)
    var = s2 * inv_n - mean * mean                            # biased var
    inv_std = lax.rsqrt(var + EPS)                            # EUP rsqrt

    gamma = gb_ref[0:1, :]
    beta = gb_ref[1:2, :]
    scale = inv_std * gamma                                   # (1, COUT)
    shift = beta - mean * scale                               # (1, COUT)

    # --- single fused FMA normalize sweep, in place over the output tile ---
    def norm_body(c, carry):
        r = pl.multiple_of(c * CHUNK, CHUNK)
        o_ref[pl.ds(r, CHUNK), :] = o_ref[pl.ds(r, CHUNK), :] * scale + shift
        return carry

    lax.fori_loop(0, n_chunks, norm_body, 0, unroll=True)


def pack_params(w_hwio, conv_bias, gamma, beta):
    """One-time constant parameter prep (hoisted out of the per-call path).

    conv_bias is accepted for API parity but is mathematically redundant under
    training-mode BN (the mean subtraction cancels it exactly).
    """
    del conv_bias  # exactly cancelled by BN mean subtraction
    w_flat = w_hwio.reshape(KRAW, COUT).astype(jnp.bfloat16)   # (27, 64)
    w_pad = jnp.pad(w_flat, ((0, KPAD - KRAW), (0, 0)))        # (32, 64) bf16
    gb = jnp.stack([gamma, beta], axis=0).astype(jnp.float32)  # (2, 64) f32
    return w_pad, gb


@jax.jit
def conv_batchnorm2d(x_nhwc, w_packed, gb):
    """x_nhwc: (N, H, W, CIN) f32 -> (N, H, W, COUT) f32."""
    # im2col in the wrapper (tiny tensors; single XLA fusion feeding the
    # kernel).  K pad is folded into the concatenate as a zeros tap.
    xb = x_nhwc.astype(jnp.bfloat16)
    xp = jnp.pad(xb, ((0, 0), (1, 1), (1, 1), (0, 0)))         # 'same' pad
    taps = []
    for kh in range(KH):
        for kw in range(KW):
            taps.append(xp[:, kh:kh + H, kw:kw + W, :])        # (N,H,W,CIN)
    taps.append(jnp.zeros((N, H, W, KPAD - KRAW), jnp.bfloat16))
    patches = jnp.concatenate(taps, axis=-1).reshape(NHW, KPAD)  # (512,32) bf16

    out = pl.pallas_call(
        conv_bn_kernel,
        out_shape=jax.ShapeDtypeStruct((NHW, COUT), jnp.float32),
        grid_spec=pltpu.PrefetchScalarGridSpec(
            num_scalar_prefetch=0,
            # Keep grid=(1,): do NOT shard across v7x TensorCores at this
            # problem size (per-step overhead + cross-core stat reduce exceeds
            # total compute).
            grid=(1,),
            in_specs=[
                pl.BlockSpec((NHW, KPAD), lambda i: (0, 0)),
                pl.BlockSpec((KPAD, COUT), lambda i: (0, 0)),
                pl.BlockSpec((2, COUT), lambda i: (0, 0)),
            ],
            out_specs=pl.BlockSpec((NHW, COUT), lambda i: (0, 0)),
        ),
        compiler_params=pltpu.CompilerParams(
            dimension_semantics=("arbitrary",)),
        cost_estimate=pl.CostEstimate(
            flops=2 * NHW * KRAW * COUT,
            transcendentals=0,
            bytes_accessed=(NHW * KPAD * 2 + KPAD * COUT * 2
                            + 2 * COUT * 4 + NHW * COUT * 4)),
    )(patches, w_packed, gb)

    # (NHW, COUT) -> (N, H, W, COUT) is a free contiguous view (no slice copy).
    return out.reshape(N, H, W, COUT)


def reference(x_nhwc, w_hwio, conv_bias, gamma, beta):
    """Plain-JAX f32 reference matching PyTorch conv(+bias) + training-mode BN."""
    conv = lax.conv_general_dilated(
        x_nhwc, w_hwio, window_strides=(1, 1), padding="SAME",
        dimension_numbers=("NHWC", "HWIO", "NHWC")) + conv_bias
    mean = conv.mean(axis=(0, 1, 2))
    var = ((conv - mean) ** 2).mean(axis=(0, 1, 2))
    return (conv - mean) / jnp.sqrt(var + EPS) * gamma + beta


if __name__ == "__main__":
    key = jax.random.PRNGKey(0)
    kx, kw, kb, kg, kbeta = jax.random.split(key, 5)

    # Deterministic synthetic parameters (shapes as in the module).
    x = jax.random.normal(kx, (N, H, W, CIN), jnp.float32)              # NHWC
    w_hwio = 0.1 * jax.random.normal(kw, (KH, KW, CIN, COUT), jnp.float32)
    conv_bias = 0.1 * jax.random.normal(kb, (COUT,), jnp.float32)
    gamma = 1.0 + 0.1 * jax.random.normal(kg, (COUT,), jnp.float32)
    beta = 0.1 * jax.random.normal(kbeta, (COUT,), jnp.float32)

    # One-time parameter packing (not on the per-call path).
    w_packed, gb = pack_params(w_hwio, conv_bias, gamma, beta)

    out = conv_batchnorm2d(x, w_packed, gb)
    out = jax.block_until_ready(out)

    ref = reference(x, w_hwio, conv_bias, gamma, beta)
    assert out.shape == (N, H, W, COUT)
    # Tolerance sized for bf16 matmul operands with f32 accumulation (the f32
    # reference conv differs from the bf16-operand kernel by ~1e-3 RMS here).
    assert jnp.allclose(out, ref, atol=2e-2, rtol=2e-2), \
        float(jnp.abs(out - ref).max())

    print("KERNEL_OK")
</pallas_src>

<mosaic_0001>
module attributes {stable_mosaic.version = 11 : i64} {
  func.func @conv_bn_kernel(%arg0: i32, %arg1: memref<512x32xbf16, #tpu.memory_space<vmem>>, %arg2: memref<32x64xbf16, #tpu.memory_space<vmem>>, %arg3: memref<2x64xf32, #tpu.memory_space<vmem>>, %arg4: memref<512x64xf32, #tpu.memory_space<vmem>>) attributes {dimension_semantics = [#tpu.dimension_semantics<arbitrary>], iteration_bounds = array<i64: 1>, scalar_prefetch = 0 : i64, scratch_operands = 0 : i64, tpu.core_type = #tpu.core_type<tc>, window_params = [{pipeline_mode = #tpu.pipeline_mode<synchronous>, transform_indices = @transform_0, window_bounds = array<i64: 512, 32>}, {pipeline_mode = #tpu.pipeline_mode<synchronous>, transform_indices = @transform_1, window_bounds = array<i64: 32, 64>}, {pipeline_mode = #tpu.pipeline_mode<synchronous>, transform_indices = @transform_2, window_bounds = array<i64: 2, 64>}, {pipeline_mode = #tpu.pipeline_mode<synchronous>, transform_indices = @transform_3, window_bounds = array<i64: 512, 64>}]} {
    %c0 = arith.constant 0 : index
    %c0_0 = arith.constant 0 : index
    %0 = vector.load %arg1[%c0, %c0_0] : memref<512x32xbf16, #tpu.memory_space<vmem>>, vector<512x32xbf16>
    %c0_1 = arith.constant 0 : index
    %c0_2 = arith.constant 0 : index
    %1 = vector.load %arg2[%c0_1, %c0_2] : memref<32x64xbf16, #tpu.memory_space<vmem>>, vector<32x64xbf16>
    %cst = arith.constant dense<0.000000e+00> : vector<512x64xf32>
    %2 = tpu.matmul %0, %1, %cst {dimension_numbers = #tpu.dot_dimension_numbers<[1], [0], [0], [1], [0, 0, 1, 1], [], []>} : vector<512x32xbf16>, vector<32x64xbf16>, vector<512x64xf32> -> vector<512x64xf32>
    %c0_3 = arith.constant 0 : index
    %c0_4 = arith.constant 0 : index
    %3 = vector.load %arg4[%c0_3, %c0_4] : memref<512x64xf32, #tpu.memory_space<vmem>>, vector<512x64xf32>
    tpu.vector_store %arg4[%c0_3, %c0_4], %2 {strides = array<i32>} : memref<512x64xf32, #tpu.memory_space<vmem>>, vector<512x64xf32>,
    %cst_5 = arith.constant 0.000000e+00 : f32
    %4 = vector.broadcast %cst_5 : f32 to vector<1x64xf32>
    %c0_i32 = arith.constant 0 : i32
    %c128_i32 = arith.constant 128 : i32
    %5 = arith.muli %c0_i32, %c128_i32 : i32
    %6 = tpu.assume_multiple %5, 128 : i32
    %7 = arith.index_cast %6 : i32 to index
    %c0_6 = arith.constant 0 : index
    %8 = vector.load %arg4[%7, %c0_6] : memref<512x64xf32, #tpu.memory_space<vmem>>, vector<128x64xf32>
    %cst_7 = arith.constant dense<0.000000e+00> : vector<64xf32>
    %9 = vector.multi_reduction <add>, %8, %cst_7 [0] : vector<128x64xf32> to vector<64xf32>
    %10 = vector.shape_cast %9 : vector<64xf32> to vector<1x64xf32>
    %11 = arith.addf %4, %10 : vector<1x64xf32>
    %12 = arith.mulf %8, %8 : vector<128x64xf32>
    %cst_8 = arith.constant dense<0.000000e+00> : vector<64xf32>
    %13 = vector.multi_reduction <add>, %12, %cst_8 [0] : vector<128x64xf32> to vector<64xf32>
    %14 = vector.shape_cast %13 : vector<64xf32> to vector<1x64xf32>
    %15 = arith.addf %4, %14 : vector<1x64xf32>
    %c1_i32 = arith.constant 1 : i32
    %c128_i32_9 = arith.constant 128 : i32
    %16 = arith.muli %c1_i32, %c128_i32_9 : i32
    %17 = tpu.assume_multiple %16, 128 : i32
    %18 = arith.index_cast %17 : i32 to index
    %c0_10 = arith.constant 0 : index
    %19 = vector.load %arg4[%18, %c0_10] : memref<512x64xf32, #tpu.memory_space<vmem>>, vector<128x64xf32>
    %cst_11 = arith.constant dense<0.000000e+00> : vector<64xf32>
    %20 = vector.multi_reduction <add>, %19, %cst_11 [0] : vector<128x64xf32> to vector<64xf32>
    %21 = vector.shape_cast %20 : vector<64xf32> to vector<1x64xf32>
    %22 = arith.addf %11, %21 : vector<1x64xf32>
    %23 = arith.mulf %19, %19 : vector<128x64xf32>
    %cst_12 = arith.constant dense<0.000000e+00> : vector<64xf32>
    %24 = vector.multi_reduction <add>, %23, %cst_12 [0] : vector<128x64xf32> to vector<64xf32>
    %25 = vector.shape_cast %24 : vector<64xf32> to vector<1x64xf32>
    %26 = arith.addf %15, %25 : vector<1x64xf32>
    %c2_i32 = arith.constant 2 : i32
    %c128_i32_13 = arith.constant 128 : i32
    %27 = arith.muli %c2_i32, %c128_i32_13 : i32
    %28 = tpu.assume_multiple %27, 128 : i32
    %29 = arith.index_cast %28 : i32 to index
    %c0_14 = arith.constant 0 : index
    %30 = vector.load %arg4[%29, %c0_14] : memref<512x64xf32, #tpu.memory_space<vmem>>, vector<128x64xf32>
    %cst_15 = arith.constant dense<0.000000e+00> : vector<64xf32>
    %31 = vector.multi_reduction <add>, %30, %cst_15 [0] : vector<128x64xf32> to vector<64xf32>
    %32 = vector.shape_cast %31 : vector<64xf32> to vector<1x64xf32>
    %33 = arith.addf %22, %32 : vector<1x64xf32>
    %34 = arith.mulf %30, %30 : vector<128x64xf32>
    %cst_16 = arith.constant dense<0.000000e+00> : vector<64xf32>
    %35 = vector.multi_reduction <add>, %34, %cst_16 [0] : vector<128x64xf32> to vector<64xf32>
    %36 = vector.shape_cast %35 : vector<64xf32> to vector<1x64xf32>
    %37 = arith.addf %26, %36 : vector<1x64xf32>
    %c3_i32 = arith.constant 3 : i32
    %c128_i32_17 = arith.constant 128 : i32
    %38 = arith.muli %c3_i32, %c128_i32_17 : i32
    %39 = tpu.assume_multiple %38, 128 : i32
    %40 = arith.index_cast %39 : i32 to index
    %c0_18 = arith.constant 0 : index
    %41 = vector.load %arg4[%40, %c0_18] : memref<512x64xf32, #tpu.memory_space<vmem>>, vector<128x64xf32>
    %cst_19 = arith.constant dense<0.000000e+00> : vector<64xf32>
    %42 = vector.multi_reduction <add>, %41, %cst_19 [0] : vector<128x64xf32> to vector<64xf32>
    %43 = vector.shape_cast %42 : vector<64xf32> to vector<1x64xf32>
    %44 = arith.addf %33, %43 : vector<1x64xf32>
    %45 = arith.mulf %41, %41 : vector<128x64xf32>
    %cst_20 = arith.constant dense<0.000000e+00> : vector<64xf32>
    %46 = vector.multi_reduction <add>, %45, %cst_20 [0] : vector<128x64xf32> to vector<64xf32>
    %47 = vector.shape_cast %46 : vector<64xf32> to vector<1x64xf32>
    %48 = arith.addf %37, %47 : vector<1x64xf32>
    %c4_i32 = arith.constant 4 : i32
    %cst_21 = arith.constant 0.001953125 : f32
    %49 = vector.broadcast %cst_21 : f32 to vector<1x64xf32>
    %50 = arith.mulf %44, %49 : vector<1x64xf32>
    %cst_22 = arith.constant 0.001953125 : f32
    %51 = vector.broadcast %cst_22 : f32 to vector<1x64xf32>
    %52 = arith.mulf %48, %51 : vector<1x64xf32>
    %53 = arith.mulf %50, %50 : vector<1x64xf32>
    %54 = arith.subf %52, %53 : vector<1x64xf32>
    %cst_23 = arith.constant 9.99999974E-6 : f32
    %55 = vector.broadcast %cst_23 : f32 to vector<1x64xf32>
    %56 = arith.addf %54, %55 : vector<1x64xf32>
    %57 = math.rsqrt %56 : vector<1x64xf32>
    %c0_24 = arith.constant 0 : index
    %c0_25 = arith.constant 0 : index
    %58 = vector.load %arg3[%c0_24, %c0_25] : memref<2x64xf32, #tpu.memory_space<vmem>>, vector<1x64xf32>
    %c1 = arith.constant 1 : index
    %c0_26 = arith.constant 0 : index
    %59 = vector.load %arg3[%c1, %c0_26] : memref<2x64xf32, #tpu.memory_space<vmem>>, vector<1x64xf32>
    %60 = arith.mulf %57, %58 : vector<1x64xf32>
    %61 = arith.mulf %50, %60 : vector<1x64xf32>
    %62 = arith.subf %59, %61 : vector<1x64xf32>
    %c0_i32_27 = arith.constant 0 : i32
    %c128_i32_28 = arith.constant 128 : i32
    %63 = arith.muli %c0_i32_27, %c128_i32_28 : i32
    %64 = tpu.assume_multiple %63, 128 : i32
    %65 = arith.index_cast %64 : i32 to index
    %c0_29 = arith.constant 0 : index
    %66 = vector.load %arg4[%65, %c0_29] : memref<512x64xf32, #tpu.memory_space<vmem>>, vector<128x64xf32>
    %67 = vector.broadcast %60 : vector<1x64xf32> to vector<128x64xf32>
    %68 = arith.mulf %66, %67 : vector<128x64xf32>
    %69 = vector.broadcast %62 : vector<1x64xf32> to vector<128x64xf32>
    %70 = arith.addf %68, %69 : vector<128x64xf32>
    %71 = arith.index_cast %64 : i32 to index
    %c0_30 = arith.constant 0 : index
    %72 = vector.load %arg4[%71, %c0_30] : memref<512x64xf32, #tpu.memory_space<vmem>>, vector<128x64xf32>
    tpu.vector_store %arg4[%71, %c0_30], %70 {strides = array<i32>} : memref<512x64xf32, #tpu.memory_space<vmem>>, vector<128x64xf32>,
    %c1_i32_31 = arith.constant 1 : i32
    %c128_i32_32 = arith.constant 128 : i32
    %73 = arith.muli %c1_i32_31, %c128_i32_32 : i32
    %74 = tpu.assume_multiple %73, 128 : i32
    %75 = arith.index_cast %74 : i32 to index
    %c0_33 = arith.constant 0 : index
    %76 = vector.load %arg4[%75, %c0_33] : memref<512x64xf32, #tpu.memory_space<vmem>>, vector<128x64xf32>
    %77 = vector.broadcast %60 : vector<1x64xf32> to vector<128x64xf32>
    %78 = arith.mulf %76, %77 : vector<128x64xf32>
    %79 = vector.broadcast %62 : vector<1x64xf32> to vector<128x64xf32>
    %80 = arith.addf %78, %79 : vector<128x64xf32>
    %81 = arith.index_cast %74 : i32 to index
    %c0_34 = arith.constant 0 : index
    %82 = vector.load %arg4[%81, %c0_34] : memref<512x64xf32, #tpu.memory_space<vmem>>, vector<128x64xf32>
    tpu.vector_store %arg4[%81, %c0_34], %80 {strides = array<i32>} : memref<512x64xf32, #tpu.memory_space<vmem>>, vector<128x64xf32>,
    %c2_i32_35 = arith.constant 2 : i32
    %c128_i32_36 = arith.constant 128 : i32
    %83 = arith.muli %c2_i32_35, %c128_i32_36 : i32
    %84 = tpu.assume_multiple %83, 128 : i32
    %85 = arith.index_cast %84 : i32 to index
    %c0_37 = arith.constant 0 : index
    %86 = vector.load %arg4[%85, %c0_37] : memref<512x64xf32, #tpu.memory_space<vmem>>, vector<128x64xf32>
    %87 = vector.broadcast %60 : vector<1x64xf32> to vector<128x64xf32>
    %88 = arith.mulf %86, %87 : vector<128x64xf32>
    %89 = vector.broadcast %62 : vector<1x64xf32> to vector<128x64xf32>
    %90 = arith.addf %88, %89 : vector<128x64xf32>
    %91 = arith.index_cast %84 : i32 to index
    %c0_38 = arith.constant 0 : index
    %92 = vector.load %arg4[%91, %c0_38] : memref<512x64xf32, #tpu.memory_space<vmem>>, vector<128x64xf32>
    tpu.vector_store %arg4[%91, %c0_38], %90 {strides = array<i32>} : memref<512x64xf32, #tpu.memory_space<vmem>>, vector<128x64xf32>,
    %c3_i32_39 = arith.constant 3 : i32
    %c128_i32_40 = arith.constant 128 : i32
    %93 = arith.muli %c3_i32_39, %c128_i32_40 : i32
    %94 = tpu.assume_multiple %93, 128 : i32
    %95 = arith.index_cast %94 : i32 to index
    %c0_41 = arith.constant 0 : index
    %96 = vector.load %arg4[%95, %c0_41] : memref<512x64xf32, #tpu.memory_space<vmem>>, vector<128x64xf32>
    %97 = vector.broadcast %60 : vector<1x64xf32> to vector<128x64xf32>
    %98 = arith.mulf %96, %97 : vector<128x64xf32>
    %99 = vector.broadcast %62 : vector<1x64xf32> to vector<128x64xf32>
    %100 = arith.addf %98, %99 : vector<128x64xf32>
    %101 = arith.index_cast %94 : i32 to index
    %c0_42 = arith.constant 0 : index
    %102 = vector.load %arg4[%101, %c0_42] : memref<512x64xf32, #tpu.memory_space<vmem>>, vector<128x64xf32>
    tpu.vector_store %arg4[%101, %c0_42], %100 {strides = array<i32>} : memref<512x64xf32, #tpu.memory_space<vmem>>, vector<128x64xf32>,
    %c4_i32_43 = arith.constant 4 : i32
    return
  }
  func.func @transform_0(%arg0: i32) -> (i32, i32) {
    %c0_i32 = arith.constant 0 : i32
    %c0_i32_0 = arith.constant 0 : i32
    %c0_i32_1 = arith.constant 0 : i32
    return %c0_i32, %c0_i32_0 : i32, i32
  }
  func.func @transform_1(%arg0: i32) -> (i32, i32) {
    %c0_i32 = arith.constant 0 : i32
    %c0_i32_0 = arith.constant 0 : i32
    %c0_i32_1 = arith.constant 0 : i32
    return %c0_i32, %c0_i32_0 : i32, i32
  }
  func.func @transform_2(%arg0: i32) -> (i32, i32) {
    %c0_i32 = arith.constant 0 : i32
    %c0_i32_0 = arith.constant 0 : i32
    %c0_i32_1 = arith.constant 0 : i32
    return %c0_i32, %c0_i32_0 : i32, i32
  }
  func.func @transform_3(%arg0: i32) -> (i32, i32) {
    %c0_i32 = arith.constant 0 : i32
    %c0_i32_0 = arith.constant 0 : i32
    %c0_i32_1 = arith.constant 0 : i32
    return %c0_i32, %c0_i32_0 : i32, i32
  }
}

</mosaic_0001>

<llo_original>
// kernel: conv_batchnorm2d.1
$region0: #{conv_batchnorm2d.1}
  #allocation0 [shape = 'u32[]', space=smem, size = 0x4, offset = 0x4, fixed_abs, tag = 'smem constant byte address 0x4 - core index']
  #allocation1 [shape = 'u32[144,128]{1,0:T(1,128)}', space=vmem, size = 0x12000, scoped, tag = 'internal scratch']
  %s0 = inlined_call_operand.vmem [shape: bf16[512,32], index: 0, kind: input, shape index: {}]
  %s1 = inlined_call_operand.vmem [shape: bf16[32,64], index: 1, kind: input, shape index: {}]
  %s2 = inlined_call_operand.vmem [shape: f32[2,64], index: 2, kind: input, shape index: {}]
  %s3 = inlined_call_operand.hbm [shape: f32[512,64], index: 3, kind: output, shape index: {}]
  %s4 = sld [smem:[#allocation0]]
  $region22: #{conv_batchnorm2d.1} parent=0
    _
  %s6 = ssub.s32 1, %s4
  %s7 = scalar_select 0, %s6, %s4
  $region1: #{conv_batchnorm2d.1} parent=0
    #allocation2 [shape = 'u8[262144]{0}', space=vmem, size = 0x40000, scoped, tag = 'output window, operand 0, single buffered']
    #allocation3 [shape = 's32[1]{0}', space=sflag, size = 0x4, scoped, tag = 'scoped memory for conv_batchnorm2d.1']
    %8 = vsyncpa [#allocation3], 0
    // Predicated region
    $region2: #{conv_batchnorm2d.1} parent=1 // pred_check
      _
    $region3: #{conv_batchnorm2d.1} parent=1 // pred_check_branch
      %10 = sbr.rel (0) target = $region5
    $region4: #{conv_batchnorm2d.1} parent=1 // pred_region
      _
    $region5: #{conv_batchnorm2d.1} parent=1 // pred_fallthru
      _
    // Predicated region
    $region6: #{conv_batchnorm2d.1} parent=1 // pred_check
      _
    $region7: #{conv_batchnorm2d.1} parent=1 // pred_check_branch
      %12 = sbr.rel (0) target = $region9
    $region8: #{conv_batchnorm2d.1} parent=1 // pred_region
      _
    $region9: #{conv_batchnorm2d.1} parent=1 // pred_fallthru
      _
    // Predicated region
    $region10: #{conv_batchnorm2d.1} parent=1 // pred_check
      _
    $region11: #{conv_batchnorm2d.1} parent=1 // pred_check_branch
      %14 = sbr.rel (0) target = $region13
    $region12: #{conv_batchnorm2d.1} parent=1 // pred_region
      _
    $region13: #{conv_batchnorm2d.1} parent=1 // pred_fallthru
      _
    %v16 = vld [vmem:[%s0] sm:$0xf]
    %v17 = vld [vmem:[%s0 + $0x4] sm:$0xf]
    %v18 = vld [vmem:[%s0 + $0x8] sm:$0xf]
    %v19 = vld [vmem:[%s0 + $0xc] sm:$0xf]
    %v20 = vld [vmem:[%s0 + $0x10] sm:$0xf]
    %v21 = vld [vmem:[%s0 + $0x14] sm:$0xf]
    %v22 = vld [vmem:[%s0 + $0x18] sm:$0xf]
    %v23 = vld [vmem:[%s0 + $0x1c] sm:$0xf]
    %v24 = vld [vmem:[%s0 + $0x20] sm:$0xf]
    %v25 = vld [vmem:[%s0 + $0x24] sm:$0xf]
    %v26 = vld [vmem:[%s0 + $0x28] sm:$0xf]
    %v27 = vld [vmem:[%s0 + $0x2c] sm:$0xf]
    %v28 = vld [vmem:[%s0 + $0x30] sm:$0xf]
    %v29 = vld [vmem:[%s0 + $0x34] sm:$0xf]
    %v30 = vld [vmem:[%s0 + $0x38] sm:$0xf]
    %v31 = vld [vmem:[%s0 + $0x3c] sm:$0xf]
    %v32 = vld [vmem:[%s0 + $0x40] sm:$0xf]
    %v33 = vld [vmem:[%s0 + $0x44] sm:$0xf]
    %v34 = vld [vmem:[%s0 + $0x48] sm:$0xf]
    %v35 = vld [vmem:[%s0 + $0x4c] sm:$0xf]
    %v36 = vld [vmem:[%s0 + $0x50] sm:$0xf]
    %v37 = vld [vmem:[%s0 + $0x54] sm:$0xf]
    %v38 = vld [vmem:[%s0 + $0x58] sm:$0xf]
    %v39 = vld [vmem:[%s0 + $0x5c] sm:$0xf]
    %v40 = vld [vmem:[%s0 + $0x60] sm:$0xf]
    %v41 = vld [vmem:[%s0 + $0x64] sm:$0xf]
    %v42 = vld [vmem:[%s0 + $0x68] sm:$0xf]
    %v43 = vld [vmem:[%s0 + $0x6c] sm:$0xf]
    %v44 = vld [vmem:[%s0 + $0x70] sm:$0xf]
    %v45 = vld [vmem:[%s0 + $0x74] sm:$0xf]
    %v46 = vld [vmem:[%s0 + $0x78] sm:$0xf]
    %v47 = vld [vmem:[%s0 + $0x7c] sm:$0xf]
    %v48 = vld [vmem:[%s0 + $0x80] sm:$0xf]
    %v49 = vld [vmem:[%s0 + $0x84] sm:$0xf]
    %v50 = vld [vmem:[%s0 + $0x88] sm:$0xf]
    %v51 = vld [vmem:[%s0 + $0x8c] sm:$0xf]
    %v52 = vld [vmem:[%s0 + $0x90] sm:$0xf]
    %v53 = vld [vmem:[%s0 + $0x94] sm:$0xf]
    %v54 = vld [vmem:[%s0 + $0x98] sm:$0xf]
    %v55 = vld [vmem:[%s0 + $0x9c] sm:$0xf]
    %v56 = vld [vmem:[%s0 + $0xa0] sm:$0xf]
    %v57 = vld [vmem:[%s0 + $0xa4] sm:$0xf]
    %v58 = vld [vmem:[%s0 + $0xa8] sm:$0xf]
    %v59 = vld [vmem:[%s0 + $0xac] sm:$0xf]
    %v60 = vld [vmem:[%s0 + $0xb0] sm:$0xf]
    %v61 = vld [vmem:[%s0 + $0xb4] sm:$0xf]
    %v62 = vld [vmem:[%s0 + $0xb8] sm:$0xf]
    %v63 = vld [vmem:[%s0 + $0xbc] sm:$0xf]
    %v64 = vld [vmem:[%s0 + $0xc0] sm:$0xf]
    %v65 = vld [vmem:[%s0 + $0xc4] sm:$0xf]
    %v66 = vld [vmem:[%s0 + $0xc8] sm:$0xf]
    %v67 = vld [vmem:[%s0 + $0xcc] sm:$0xf]
    %v68 = vld [vmem:[%s0 + $0xd0] sm:$0xf]
    %v69 = vld [vmem:[%s0 + $0xd4] sm:$0xf]
    %v70 = vld [vmem:[%s0 + $0xd8] sm:$0xf]
    %v71 = vld [vmem:[%s0 + $0xdc] sm:$0xf]
    %v72 = vld [vmem:[%s0 + $0xe0] sm:$0xf]
    %v73 = vld [vmem:[%s0 + $0xe4] sm:$0xf]
    %v74 = vld [vmem:[%s0 + $0xe8] sm:$0xf]
    %v75 = vld [vmem:[%s0 + $0xec] sm:$0xf]
    %v76 = vld [vmem:[%s0 + $0xf0] sm:$0xf]
    %v77 = vld [vmem:[%s0 + $0xf4] sm:$0xf]
    %v78 = vld [vmem:[%s0 + $0xf8] sm:$0xf]
    %v79 = vld [vmem:[%s0 + $0xfc] sm:$0xf]
    %v80 = vld [vmem:[%s1] sm:$0xf]
    %v81 = vld [vmem:[%s1 + $0x4] sm:$0xf]
    %v82 = vld [vmem:[%s1 + $0x8] sm:$0xf]
    %v83 = vld [vmem:[%s1 + $0xc] sm:$0xf]
    %v148 = vunpack.c.l.b16 %v16
    %v149 = vunpack.c.l.b16 %v17
    %v150 = vunpack.c.l.b16 %v18
    %v151 = vunpack.c.l.b16 %v19
    %v152 = vunpack.c.l.b16 %v20
    %v153 = vunpack.c.l.b16 %v21
    %v154 = vunpack.c.l.b16 %v22
    %v155 = vunpack.c.l.b16 %v23
    %v156 = vunpack.c.l.b16 %v24
    %v157 = vunpack.c.l.b16 %v25
    %v158 = vunpack.c.l.b16 %v26
    %v159 = vunpack.c.l.b16 %v27
    %v160 = vunpack.c.l.b16 %v28
    %v161 = vunpack.c.l.b16 %v29
    %v162 = vunpack.c.l.b16 %v30
    %v163 = vunpack.c.l.b16 %v31
    %v164 = vunpack.c.l.b16 %v32
    %v165 = vunpack.c.l.b16 %v33
    %v166 = vunpack.c.l.b16 %v34
    %v167 = vunpack.c.l.b16 %v35
    %v168 = vunpack.c.l.b16 %v36
    %v169 = vunpack.c.l.b16 %v37
    %v170 = vunpack.c.l.b16 %v38
    %v171 = vunpack.c.l.b16 %v39
    %v172 = vunpack.c.l.b16 %v40
    %v173 = vunpack.c.l.b16 %v41
    %v174 = vunpack.c.l.b16 %v42
    %v175 = vunpack.c.l.b16 %v43
    %v176 = vunpack.c.l.b16 %v44
    %v177 = vunpack.c.l.b16 %v45
    %v178 = vunpack.c.l.b16 %v46
    %v179 = vunpack.c.l.b16 %v47
    %v180 = vunpack.c.l.b16 %v48
    %v181 = vunpack.c.l.b16 %v49
    %v182 = vunpack.c.l.b16 %v50
    %v183 = vunpack.c.l.b16 %v51
    %v184 = vunpack.c.l.b16 %v52
    %v185 = vunpack.c.l.b16 %v53
    %v186 = vunpack.c.l.b16 %v54
    %v187 = vunpack.c.l.b16 %v55
    %v188 = vunpack.c.l.b16 %v56
    %v189 = vunpack.c.l.b16 %v57
    %v190 = vunpack.c.l.b16 %v58
    %v191 = vunpack.c.l.b16 %v59
    %v192 = vunpack.c.l.b16 %v60
    %v193 = vunpack.c.l.b16 %v61
    %v194 = vunpack.c.l.b16 %v62
    %v195 = vunpack.c.l.b16 %v63
    %v196 = vunpack.c.l.b16 %v64
    %v197 = vunpack.c.l.b16 %v65
    %v198 = vunpack.c.l.b16 %v66
    %v199 = vunpack.c.l.b16 %v67
    %v200 = vunpack.c.l.b16 %v68
    %v201 = vunpack.c.l.b16 %v69
    %v202 = vunpack.c.l.b16 %v70
    %v203 = vunpack.c.l.b16 %v71
    %v204 = vunpack.c.l.b16 %v72
    %v205 = vunpack.c.l.b16 %v73
    %v206 = vunpack.c.l.b16 %v74
    %v207 = vunpack.c.l.b16 %v75
    %v208 = vunpack.c.l.b16 %v76
    %v209 = vunpack.c.l.b16 %v77
    %v210 = vunpack.c.l.b16 %v78
    %v211 = vunpack.c.l.b16 %v79
    %v212 = vpack.c.b16 %v149, %v148
    %v213 = vpack.c.b16 %v151, %v150
    %v214 = vpack.c.b16 %v153, %v152
    %v215 = vpack.c.b16 %v155, %v154
    %v216 = vpack.c.b16 %v157, %v156
    %v217 = vpack.c.b16 %v159, %v158
    %v218 = vpack.c.b16 %v161, %v160
    %v219 = vpack.c.b16 %v163, %v162
    %v220 = vpack.c.b16 %v165, %v164
    %v221 = vpack.c.b16 %v167, %v166
    %v222 = vpack.c.b16 %v169, %v168
    %v223 = vpack.c.b16 %v171, %v170
    %v224 = vpack.c.b16 %v173, %v172
    %v225 = vpack.c.b16 %v175, %v174
    %v226 = vpack.c.b16 %v177, %v176
    %v227 = vpack.c.b16 %v179, %v178
    %v228 = vpack.c.b16 %v181, %v180
    %v229 = vpack.c.b16 %v183, %v182
    %v230 = vpack.c.b16 %v185, %v184
    %v231 = vpack.c.b16 %v187, %v186
    %v232 = vpack.c.b16 %v189, %v188
    %v233 = vpack.c.b16 %v191, %v190
    %v234 = vpack.c.b16 %v193, %v192
    %v235 = vpack.c.b16 %v195, %v194
    %v236 = vpack.c.b16 %v197, %v196
    %v237 = vpack.c.b16 %v199, %v198
    %v238 = vpack.c.b16 %v201, %v200
    %v239 = vpack.c.b16 %v203, %v202
    %v240 = vpack.c.b16 %v205, %v204
    %v241 = vpack.c.b16 %v207, %v206
    %v242 = vpack.c.b16 %v209, %v208
    %v243 = vpack.c.b16 %v211, %v210
    %v248 = vunpack.c.l.b16 %v80
    %v249 = vunpack.c.l.b16 %v81
    %v250 = vunpack.c.l.b16 %v82
    %v251 = vunpack.c.l.b16 %v83
    %v252 = vpack.c.b16 %v249, %v248
    %v253 = vpack.c.b16 %v251, %v250
    %vm256 = vcmask 261120
    %v258 = vsel %vm256, %v212, 0
    %v261 = vsel %vm256, %v213, 0
    %v264 = vsel %vm256, %v214, 0
    %v267 = vsel %vm256, %v215, 0
    %v270 = vsel %vm256, %v216, 0
    %v273 = vsel %vm256, %v217, 0
    %v276 = vsel %vm256, %v218, 0
    %v279 = vsel %vm256, %v219, 0
    %v282 = vsel %vm256, %v220, 0
    %v285 = vsel %vm256, %v221, 0
    %v288 = vsel %vm256, %v222, 0
    %v291 = vsel %vm256, %v223, 0
    %v294 = vsel %vm256, %v224, 0
    %v297 = vsel %vm256, %v225, 0
    %v300 = vsel %vm256, %v226, 0
    %v303 = vsel %vm256, %v227, 0
    %v306 = vsel %vm256, %v228, 0
    %v309 = vsel %vm256, %v229, 0
    %v312 = vsel %vm256, %v230, 0
    %v315 = vsel %vm256, %v231, 0
    %v318 = vsel %vm256, %v232, 0
    %v321 = vsel %vm256, %v233, 0
    %v324 = vsel %vm256, %v234, 0
    %v327 = vsel %vm256, %v235, 0
    %v330 = vsel %vm256, %v236, 0
    %v333 = vsel %vm256, %v237, 0
    %v336 = vsel %vm256, %v238, 0
    %v339 = vsel %vm256, %v239, 0
    %v342 = vsel %vm256, %v240, 0
    %v345 = vsel %vm256, %v241, 0
    %v348 = vsel %vm256, %v242, 0
    %v351 = vsel %vm256, %v243, 0
    %353 = vmatprep.subr.bf16.mxu0 0
    %354 = vmatpush1.bf16.msra.mxu0 %v252
    %355 = vmatprep.subr.bf16.mxu0 0
    %356 = vmatpush1.bf16.msra.mxu0 %v253
    %357 = vmatprep.subr.bf16.mxu0 0
    %358 = vmatpush1.bf16.msra.mxu0 0
    %359 = vmatprep.subr.bf16.mxu0 0
    %360 = vmatpush1.bf16.msra.mxu0 0
    %361 = vmatprep.subr.bf16.mxu0 0
    %362 = vmatpush1.bf16.msra.mxu0 0
    %363 = vmatprep.subr.bf16.mxu0 0
    %364 = vmatpush1.bf16.msra.mxu0 0
    %365 = vmatprep.subr.bf16.mxu0 0
    %366 = vmatpush1.bf16.msra.mxu0 0
    %367 = vmatprep.subr.bf16.mxu0 0
    %368 = vmatpush1.bf16.msra.mxu0 0
    %369 = vmatprep.subr.bf16.mxu0 0
    %370 = vmatpush1.bf16.msra.mxu0 0
    %371 = vmatprep.subr.bf16.mxu0 0
    %372 = vmatpush1.bf16.msra.mxu0 0
    %373 = vmatprep.subr.bf16.mxu0 0
    %374 = vmatpush1.bf16.msra.mxu0 0
    %375 = vmatprep.subr.bf16.mxu0 0
    %376 = vmatpush1.bf16.msra.mxu0 0
    %377 = vmatprep.subr.bf16.mxu0 0
    %378 = vmatpush1.bf16.msra.mxu0 0
    %379 = vmatprep.subr.bf16.mxu0 0
    %380 = vmatpush1.bf16.msra.mxu0 0
    %381 = vmatprep.subr.bf16.mxu0 0
    %382 = vmatpush1.bf16.msra.mxu0 0
    %383 = vmatprep.subr.bf16.mxu0 0
    %384 = vmatpush1.bf16.msra.mxu0 0
    %385 = vmatprep.mubr.bf16.mxu0 0
    %386 = vmatmul.mubr.bf16.gmra.mrb[0].mxu0 %v258
    %v387 = vpop.f32.mrb[0].mxu0
    %v388 = vadd.f32 0.0, %v387
    %v389 = vpop.f32.mrb[0].mxu0
    %v390 = vpop.f32.mrb[0].mxu0
    %v391 = vadd.f32 0.0, %v390
    %v392 = vpop.f32.mrb[0].mxu0
    %393 = vmatprep.mubr.bf16.mxu0 0
    %394 = vmatmul.mubr.bf16.gmra.mrb[0].mxu0 %v261
    %v395 = vpop.f32.mrb[0].mxu0
    %v396 = vadd.f32 0.0, %v395
    %v397 = vpop.f32.mrb[0].mxu0
    %v398 = vpop.f32.mrb[0].mxu0
    %v399 = vadd.f32 0.0, %v398
    %v400 = vpop.f32.mrb[0].mxu0
    %401 = vmatprep.mubr.bf16.mxu0 0
    %402 = vmatmul.mubr.bf16.gmra.mrb[0].mxu0 %v264
    %v403 = vpop.f32.mrb[0].mxu0
    %v404 = vadd.f32 0.0, %v403
    %v405 = vpop.f32.mrb[0].mxu0
    %v406 = vpop.f32.mrb[0].mxu0
    %v407 = vadd.f32 0.0, %v406
    %v408 = vpop.f32.mrb[0].mxu0
    %409 = vmatprep.mubr.bf16.mxu0 0
    %410 = vmatmul.mubr.bf16.gmra.mrb[0].mxu0 %v267
    %v411 = vpop.f32.mrb[0].mxu0
    %v412 = vadd.f32 0.0, %v411
    %v413 = vpop.f32.mrb[0].mxu0
    %v414 = vpop.f32.mrb[0].mxu0
    %v415 = vadd.f32 0.0, %v414
    %v416 = vpop.f32.mrb[0].mxu0
    %417 = vmatprep.mubr.bf16.mxu0 0
    %418 = vmatmul.mubr.bf16.gmra.mrb[0].mxu0 %v270
    %v419 = vpop.f32.mrb[0].mxu0
    %v420 = vadd.f32 0.0, %v419
    %v421 = vpop.f32.mrb[0].mxu0
    %v422 = vpop.f32.mrb[0].mxu0
    %v423 = vadd.f32 0.0, %v422
    %v424 = vpop.f32.mrb[0].mxu0
    %425 = vmatprep.mubr.bf16.mxu0 0
    %426 = vmatmul.mubr.bf16.gmra.mrb[0].mxu0 %v273
    %v427 = vpop.f32.mrb[0].mxu0
    %v428 = vadd.f32 0.0, %v427
    %v429 = vpop.f32.mrb[0].mxu0
    %v430 = vpop.f32.mrb[0].mxu0
    %v431 = vadd.f32 0.0, %v430
    %v432 = vpop.f32.mrb[0].mxu0
    %433 = vmatprep.mubr.bf16.mxu0 0
    %434 = vmatmul.mubr.bf16.gmra.mrb[0].mxu0 %v276
    %v435 = vpop.f32.mrb[0].mxu0
    %v436 = vadd.f32 0.0, %v435
    %v437 = vpop.f32.mrb[0].mxu0
    %v438 = vpop.f32.mrb[0].mxu0
    %v439 = vadd.f32 0.0, %v438
    %v440 = vpop.f32.mrb[0].mxu0
    %441 = vmatprep.mubr.bf16.mxu0 0
    %442 = vmatmul.mubr.bf16.gmra.mrb[0].mxu0 %v279
    %v443 = vpop.f32.mrb[0].mxu0
    %v444 = vadd.f32 0.0, %v443
    %v445 = vpop.f32.mrb[0].mxu0
    %v446 = vpop.f32.mrb[0].mxu0
    %v447 = vadd.f32 0.0, %v446
    %v448 = vpop.f32.mrb[0].mxu0
    %449 = vmatprep.mubr.bf16.mxu0 0
    %450 = vmatmul.mubr.bf16.gmra.mrb[0].mxu0 %v282
    %v451 = vpop.f32.mrb[0].mxu0
    %v452 = vadd.f32 0.0, %v451
    %v453 = vpop.f32.mrb[0].mxu0
    %v454 = vpop.f32.mrb[0].mxu0
    %v455 = vadd.f32 0.0, %v454
    %v456 = vpop.f32.mrb[0].mxu0
    %457 = vmatprep.mubr.bf16.mxu0 0
    %458 = vmatmul.mubr.bf16.gmra.mrb[0].mxu0 %v285
    %v459 = vpop.f32.mrb[0].mxu0
    %v460 = vadd.f32 0.0, %v459
    %v461 = vpop.f32.mrb[0].mxu0
    %v462 = vpop.f32.mrb[0].mxu0
    %v463 = vadd.f32 0.0, %v462
    %v464 = vpop.f32.mrb[0].mxu0
    %465 = vmatprep.mubr.bf16.mxu0 0
    %466 = vmatmul.mubr.bf16.gmra.mrb[0].mxu0 %v288
    %v467 = vpop.f32.mrb[0].mxu0
    %v468 = vadd.f32 0.0, %v467
    %v469 = vpop.f32.mrb[0].mxu0
    %v470 = vpop.f32.mrb[0].mxu0
    %v471 = vadd.f32 0.0, %v470
    %v472 = vpop.f32.mrb[0].mxu0
    %473 = vmatprep.mubr.bf16.mxu0 0
    %474 = vmatmul.mubr.bf16.gmra.mrb[0].mxu0 %v291
    %v475 = vpop.f32.mrb[0].mxu0
    %v476 = vadd.f32 0.0, %v475
    %v477 = vpop.f32.mrb[0].mxu0
    %v478 = vpop.f32.mrb[0].mxu0
    %v479 = vadd.f32 0.0, %v478
    %v480 = vpop.f32.mrb[0].mxu0
    %481 = vmatprep.mubr.bf16.mxu0 0
    %482 = vmatmul.mubr.bf16.gmra.mrb[0].mxu0 %v294
    %v483 = vpop.f32.mrb[0].mxu0
    %v484 = vadd.f32 0.0, %v483
    %v485 = vpop.f32.mrb[0].mxu0
    %v486 = vpop.f32.mrb[0].mxu0
    %v487 = vadd.f32 0.0, %v486
    %v488 = vpop.f32.mrb[0].mxu0
    %489 = vmatprep.mubr.bf16.mxu0 0
    %490 = vmatmul.mubr.bf16.gmra.mrb[0].mxu0 %v297
    %v491 = vpop.f32.mrb[0].mxu0
    %v492 = vadd.f32 0.0, %v491
    %v493 = vpop.f32.mrb[0].mxu0
    %v494 = vpop.f32.mrb[0].mxu0
    %v495 = vadd.f32 0.0, %v494
    %v496 = vpop.f32.mrb[0].mxu0
    %497 = vmatprep.mubr.bf16.mxu0 0
    %498 = vmatmul.mubr.bf16.gmra.mrb[0].mxu0 %v300
    %v499 = vpop.f32.mrb[0].mxu0
    %v500 = vadd.f32 0.0, %v499
    %v501 = vpop.f32.mrb[0].mxu0
    %v502 = vpop.f32.mrb[0].mxu0
    %v503 = vadd.f32 0.0, %v502
    %v504 = vpop.f32.mrb[0].mxu0
    %505 = vmatprep.mubr.bf16.mxu0 0
    %506 = vmatmul.mubr.bf16.gmra.mrb[0].mxu0 %v303
    %v507 = vpop.f32.mrb[0].mxu0
    %v508 = vadd.f32 0.0, %v507
    %v509 = vpop.f32.mrb[0].mxu0
    %v510 = vpop.f32.mrb[0].mxu0
    %v511 = vadd.f32 0.0, %v510
    %v512 = vpop.f32.mrb[0].mxu0
    %513 = vmatprep.mubr.bf16.mxu0 0
    %514 = vmatmul.mubr.bf16.gmra.mrb[0].mxu0 %v306
    %v515 = vpop.f32.mrb[0].mxu0
    %v516 = vadd.f32 0.0, %v515
    %v517 = vpop.f32.mrb[0].mxu0
    %v518 = vpop.f32.mrb[0].mxu0
    %v519 = vadd.f32 0.0, %v518
    %v520 = vpop.f32.mrb[0].mxu0
    %521 = vmatprep.mubr.bf16.mxu0 0
    %522 = vmatmul.mubr.bf16.gmra.mrb[0].mxu0 %v309
    %v523 = vpop.f32.mrb[0].mxu0
    %v524 = vadd.f32 0.0, %v523
    %v525 = vpop.f32.mrb[0].mxu0
    %v526 = vpop.f32.mrb[0].mxu0
    %v527 = vadd.f32 0.0, %v526
    %v528 = vpop.f32.mrb[0].mxu0
    %529 = vmatprep.mubr.bf16.mxu0 0
    %530 = vmatmul.mubr.bf16.gmra.mrb[0].mxu0 %v312
    %v531 = vpop.f32.mrb[0].mxu0
    %v532 = vadd.f32 0.0, %v531
    %v533 = vpop.f32.mrb[0].mxu0
    %v534 = vpop.f32.mrb[0].mxu0
    %v535 = vadd.f32 0.0, %v534
    %v536 = vpop.f32.mrb[0].mxu0
    %537 = vmatprep.mubr.bf16.mxu0 0
    %538 = vmatmul.mubr.bf16.gmra.mrb[0].mxu0 %v315
    %v539 = vpop.f32.mrb[0].mxu0
    %v540 = vadd.f32 0.0, %v539
    %v541 = vpop.f32.mrb[0].mxu0
    %v542 = vpop.f32.mrb[0].mxu0
    %v543 = vadd.f32 0.0, %v542
    %v544 = vpop.f32.mrb[0].mxu0
    %545 = vmatprep.mubr.bf16.mxu0 0
    %546 = vmatmul.mubr.bf16.gmra.mrb[0].mxu0 %v318
    %v547 = vpop.f32.mrb[0].mxu0
    %v548 = vadd.f32 0.0, %v547
    %v549 = vpop.f32.mrb[0].mxu0
    %v550 = vpop.f32.mrb[0].mxu0
    %v551 = vadd.f32 0.0, %v550
    %v552 = vpop.f32.mrb[0].mxu0
    %553 = vmatprep.mubr.bf16.mxu0 0
    %554 = vmatmul.mubr.bf16.gmra.mrb[0].mxu0 %v321
    %v555 = vpop.f32.mrb[0].mxu0
    %v556 = vadd.f32 0.0, %v555
    %v557 = vpop.f32.mrb[0].mxu0
    %v558 = vpop.f32.mrb[0].mxu0
    %v559 = vadd.f32 0.0, %v558
    %v560 = vpop.f32.mrb[0].mxu0
    %561 = vmatprep.mubr.bf16.mxu0 0
    %562 = vmatmul.mubr.bf16.gmra.mrb[0].mxu0 %v324
    %v563 = vpop.f32.mrb[0].mxu0
    %v564 = vadd.f32 0.0, %v563
    %v565 = vpop.f32.mrb[0].mxu0
    %v566 = vpop.f32.mrb[0].mxu0
    %v567 = vadd.f32 0.0, %v566
    %v568 = vpop.f32.mrb[0].mxu0
    %569 = vmatprep.mubr.bf16.mxu0 0
    %570 = vmatmul.mubr.bf16.gmra.mrb[0].mxu0 %v327
    %v571 = vpop.f32.mrb[0].mxu0
    %v572 = vadd.f32 0.0, %v571
    %v573 = vpop.f32.mrb[0].mxu0
    %v574 = vpop.f32.mrb[0].mxu0
    %v575 = vadd.f32 0.0, %v574
    %v576 = vpop.f32.mrb[0].mxu0
    %577 = vmatprep.mubr.bf16.mxu0 0
    %578 = vmatmul.mubr.bf16.gmra.mrb[0].mxu0 %v330
    %v579 = vpop.f32.mrb[0].mxu0
    %v580 = vadd.f32 0.0, %v579
    %v581 = vpop.f32.mrb[0].mxu0
    %v582 = vpop.f32.mrb[0].mxu0
    %v583 = vadd.f32 0.0, %v582
    %v584 = vpop.f32.mrb[0].mxu0
    %585 = vmatprep.mubr.bf16.mxu0 0
    %586 = vmatmul.mubr.bf16.gmra.mrb[0].mxu0 %v333
    %v587 = vpop.f32.mrb[0].mxu0
    %v588 = vadd.f32 0.0, %v587
    %v589 = vpop.f32.mrb[0].mxu0
    %v590 = vpop.f32.mrb[0].mxu0
    %v591 = vadd.f32 0.0, %v590
    %v592 = vpop.f32.mrb[0].mxu0
    %593 = vmatprep.mubr.bf16.mxu0 0
    %594 = vmatmul.mubr.bf16.gmra.mrb[0].mxu0 %v336
    %v595 = vpop.f32.mrb[0].mxu0
    %v596 = vadd.f32 0.0, %v595
    %v597 = vpop.f32.mrb[0].mxu0
    %v598 = vpop.f32.mrb[0].mxu0
    %v599 = vadd.f32 0.0, %v598
    %v600 = vpop.f32.mrb[0].mxu0
    %601 = vmatprep.mubr.bf16.mxu0 0
    %602 = vmatmul.mubr.bf16.gmra.mrb[0].mxu0 %v339
    %v603 = vpop.f32.mrb[0].mxu0
    %v604 = vadd.f32 0.0, %v603
    %v605 = vpop.f32.mrb[0].mxu0
    %v606 = vpop.f32.mrb[0].mxu0
    %v607 = vadd.f32 0.0, %v606
    %v608 = vpop.f32.mrb[0].mxu0
    %609 = vmatprep.mubr.bf16.mxu0 0
    %610 = vmatmul.mubr.bf16.gmra.mrb[0].mxu0 %v342
    %v611 = vpop.f32.mrb[0].mxu0
    %v612 = vadd.f32 0.0, %v611
    %v613 = vpop.f32.mrb[0].mxu0
    %v614 = vpop.f32.mrb[0].mxu0
    %v615 = vadd.f32 0.0, %v614
    %v616 = vpop.f32.mrb[0].mxu0
    %617 = vmatprep.mubr.bf16.mxu0 0
    %618 = vmatmul.mubr.bf16.gmra.mrb[0].mxu0 %v345
    %v619 = vpop.f32.mrb[0].mxu0
    %v620 = vadd.f32 0.0, %v619
    %v621 = vpop.f32.mrb[0].mxu0
    %v622 = vpop.f32.mrb[0].mxu0
    %v623 = vadd.f32 0.0, %v622
    %v624 = vpop.f32.mrb[0].mxu0
    %625 = vmatprep.mubr.bf16.mxu0 0
    %626 = vmatmul.mubr.bf16.gmra.mrb[0].mxu0 %v348
    %v627 = vpop.f32.mrb[0].mxu0
    %v628 = vadd.f32 0.0, %v627
    %v629 = vpop.f32.mrb[0].mxu0
    %v630 = vpop.f32.mrb[0].mxu0
    %v631 = vadd.f32 0.0, %v630
    %v632 = vpop.f32.mrb[0].mxu0
    %633 = vmatprep.mubr.bf16.mxu0 0
    %634 = vmatmul.mubr.bf16.gmra.mrb[0].mxu0 %v351
    %v635 = vpop.f32.mrb[0].mxu0
    %v636 = vadd.f32 0.0, %v635
    %v637 = vpop.f32.mrb[0].mxu0
    %v638 = vpop.f32.mrb[0].mxu0
    %v639 = vadd.f32 0.0, %v638
    %v640 = vpop.f32.mrb[0].mxu0
    %641 = vdwg.mxu0
    %vm642 = vcmask 523264
    %643 = vst.msk [vmem:[#allocation2] sm:$0xff] %vm642, %v388
    %644 = vst.msk [vmem:[#allocation2 + $0x8] sm:$0xff] %vm642, %v391
    %645 = vst.msk [vmem:[#allocation2 + $0x10] sm:$0xff] %vm642, %v396
    %646 = vst.msk [vmem:[#allocation2 + $0x18] sm:$0xff] %vm642, %v399
    %647 = vst.msk [vmem:[#allocation2 + $0x20] sm:$0xff] %vm642, %v404
    %648 = vst.msk [vmem:[#allocation2 + $0x28] sm:$0xff] %vm642, %v407
    %649 = vst.msk [vmem:[#allocation2 + $0x30] sm:$0xff] %vm642, %v412
    %650 = vst.msk [vmem:[#allocation2 + $0x38] sm:$0xff] %vm642, %v415
    %651 = vst.msk [vmem:[#allocation2 + $0x40] sm:$0xff] %vm642, %v420
    %652 = vst.msk [vmem:[#allocation2 + $0x48] sm:$0xff] %vm642, %v423
    %653 = vst.msk [vmem:[#allocation2 + $0x50] sm:$0xff] %vm642, %v428
    %654 = vst.msk [vmem:[#allocation2 + $0x58] sm:$0xff] %vm642, %v431
    %655 = vst.msk [vmem:[#allocation2 + $0x60] sm:$0xff] %vm642, %v436
    %656 = vst.msk [vmem:[#allocation2 + $0x68] sm:$0xff] %vm642, %v439
    %657 = vst.msk [vmem:[#allocation2 + $0x70] sm:$0xff] %vm642, %v444
    %658 = vst.msk [vmem:[#allocation2 + $0x78] sm:$0xff] %vm642, %v447
    %659 = vst.msk [vmem:[#allocation2 + $0x80] sm:$0xff] %vm642, %v452
    %660 = vst.msk [vmem:[#allocation2 + $0x88] sm:$0xff] %vm642, %v455
    %661 = vst.msk [vmem:[#allocation2 + $0x90] sm:$0xff] %vm642, %v460
    %662 = vst.msk [vmem:[#allocation2 + $0x98] sm:$0xff] %vm642, %v463
    %663 = vst.msk [vmem:[#allocation2 + $0xa0] sm:$0xff] %vm642, %v468
    %664 = vst.msk [vmem:[#allocation2 + $0xa8] sm:$0xff] %vm642, %v471
    %665 = vst.msk [vmem:[#allocation2 + $0xb0] sm:$0xff] %vm642, %v476
    %666 = vst.msk [vmem:[#allocation2 + $0xb8] sm:$0xff] %vm642, %v479
    %667 = vst.msk [vmem:[#allocation2 + $0xc0] sm:$0xff] %vm642, %v484
    %668 = vst.msk [vmem:[#allocation2 + $0xc8] sm:$0xff] %vm642, %v487
    %669 = vst.msk [vmem:[#allocation2 + $0xd0] sm:$0xff] %vm642, %v492
    %670 = vst.msk [vmem:[#allocation2 + $0xd8] sm:$0xff] %vm642, %v495
    %671 = vst.msk [vmem:[#allocation2 + $0xe0] sm:$0xff] %vm642, %v500
    %672 = vst.msk [vmem:[#allocation2 + $0xe8] sm:$0xff] %vm642, %v503
    %673 = vst.msk [vmem:[#allocation2 + $0xf0] sm:$0xff] %vm642, %v508
    %674 = vst.msk [vmem:[#allocation2 + $0xf8] sm:$0xff] %vm642, %v511
    %675 = vst.msk [vmem:[#allocation2 + $0x100] sm:$0xff] %vm642, %v516
    %676 = vst.msk [vmem:[#allocation2 + $0x108] sm:$0xff] %vm642, %v519
    %677 = vst.msk [vmem:[#allocation2 + $0x110] sm:$0xff] %vm642, %v524
    %678 = vst.msk [vmem:[#allocation2 + $0x118] sm:$0xff] %vm642, %v527
    %679 = vst.msk [vmem:[#allocation2 + $0x120] sm:$0xff] %vm642, %v532
    %680 = vst.msk [vmem:[#allocation2 + $0x128] sm:$0xff] %vm642, %v535
    %681 = vst.msk [vmem:[#allocation2 + $0x130] sm:$0xff] %vm642, %v540
    %682 = vst.msk [vmem:[#allocation2 + $0x138] sm:$0xff] %vm642, %v543
    %683 = vst.msk [vmem:[#allocation2 + $0x140] sm:$0xff] %vm642, %v548
    %684 = vst.msk [vmem:[#allocation2 + $0x148] sm:$0xff] %vm642, %v551
    %685 = vst.msk [vmem:[#allocation2 + $0x150] sm:$0xff] %vm642, %v556
    %686 = vst.msk [vmem:[#allocation2 + $0x158] sm:$0xff] %vm642, %v559
    %687 = vst.msk [vmem:[#allocation2 + $0x160] sm:$0xff] %vm642, %v564
    %688 = vst.msk [vmem:[#allocation2 + $0x168] sm:$0xff] %vm642, %v567
    %689 = vst.msk [vmem:[#allocation2 + $0x170] sm:$0xff] %vm642, %v572
    %690 = vst.msk [vmem:[#allocation2 + $0x178] sm:$0xff] %vm642, %v575
    %691 = vst.msk [vmem:[#allocation2 + $0x180] sm:$0xff] %vm642, %v580
    %692 = vst.msk [vmem:[#allocation2 + $0x188] sm:$0xff] %vm642, %v583
    %693 = vst.msk [vmem:[#allocation2 + $0x190] sm:$0xff] %vm642, %v588
    %694 = vst.msk [vmem:[#allocation2 + $0x198] sm:$0xff] %vm642, %v591
    %695 = vst.msk [vmem:[#allocation2 + $0x1a0] sm:$0xff] %vm642, %v596
    %696 = vst.msk [vmem:[#allocation2 + $0x1a8] sm:$0xff] %vm642, %v599
    %697 = vst.msk [vmem:[#allocation2 + $0x1b0] sm:$0xff] %vm642, %v604
    %698 = vst.msk [vmem:[#allocation2 + $0x1b8] sm:$0xff] %vm642, %v607
    %699 = vst.msk [vmem:[#allocation2 + $0x1c0] sm:$0xff] %vm642, %v612
    %700 = vst.msk [vmem:[#allocation2 + $0x1c8] sm:$0xff] %vm642, %v615
    %701 = vst.msk [vmem:[#allocation2 + $0x1d0] sm:$0xff] %vm642, %v620
    %702 = vst.msk [vmem:[#allocation2 + $0x1d8] sm:$0xff] %vm642, %v623
    %703 = vst.msk [vmem:[#allocation2 + $0x1e0] sm:$0xff] %vm642, %v628
    %704 = vst.msk [vmem:[#allocation2 + $0x1e8] sm:$0xff] %vm642, %v631
    %705 = vst.msk [vmem:[#allocation2 + $0x1f0] sm:$0xff] %vm642, %v636
    %706 = vst.msk [vmem:[#allocation2 + $0x1f8] sm:$0xff] %vm642, %v639
    %v707 = vld [vmem:[#allocation2] sm:$0xff]
    %v708 = vld [vmem:[#allocation2 + $0x8] sm:$0xff]
    %v709 = vld [vmem:[#allocation2 + $0x10] sm:$0xff]
    %v710 = vld [vmem:[#allocation2 + $0x18] sm:$0xff]
    %v711 = vld [vmem:[#allocation2 + $0x20] sm:$0xff]
    %v712 = vld [vmem:[#allocation2 + $0x28] sm:$0xff]
    %v713 = vld [vmem:[#allocation2 + $0x30] sm:$0xff]
    %v714 = vld [vmem:[#allocation2 + $0x38] sm:$0xff]
    %v715 = vld [vmem:[#allocation2 + $0x40] sm:$0xff]
    %v716 = vld [vmem:[#allocation2 + $0x48] sm:$0xff]
    %v717 = vld [vmem:[#allocation2 + $0x50] sm:$0xff]
    %v718 = vld [vmem:[#allocation2 + $0x58] sm:$0xff]
    %v719 = vld [vmem:[#allocation2 + $0x60] sm:$0xff]
    %v720 = vld [vmem:[#allocation2 + $0x68] sm:$0xff]
    %v721 = vld [vmem:[#allocation2 + $0x70] sm:$0xff]
    %v722 = vld [vmem:[#allocation2 + $0x78] sm:$0xff]
    %v723 = vsel %vm642, %v707, 0.0
    %v724 = vsel %vm642, %v708, 0.0
    %v725 = vadd.f32 %v723, %v724
    %v726 = vsel %vm642, %v709, 0.0
    %v727 = vadd.f32 %v725, %v726
    %v728 = vsel %vm642, %v710, 0.0
    %v729 = vadd.f32 %v727, %v728
    %v730 = vsel %vm642, %v711, 0.0
    %v731 = vadd.f32 %v729, %v730
    %v732 = vsel %vm642, %v712, 0.0
    %v733 = vadd.f32 %v731, %v732
    %v734 = vsel %vm642, %v713, 0.0
    %v735 = vadd.f32 %v733, %v734
    %v736 = vsel %vm642, %v714, 0.0
    %v737 = vadd.f32 %v735, %v736
    %v738 = vsel %vm642, %v715, 0.0
    %v739 = vadd.f32 %v737, %v738
    %v740 = vsel %vm642, %v716, 0.0
    %v741 = vadd.f32 %v739, %v740
    %v742 = vsel %vm642, %v717, 0.0
    %v743 = vadd.f32 %v741, %v742
    %v744 = vsel %vm642, %v718, 0.0
    %v745 = vadd.f32 %v743, %v744
    %v746 = vsel %vm642, %v719, 0.0
    %v747 = vadd.f32 %v745, %v746
    %v748 = vsel %vm642, %v720, 0.0
    %v749 = vadd.f32 %v747, %v748
    %v750 = vsel %vm642, %v721, 0.0
    %v751 = vadd.f32 %v749, %v750
    %v752 = vsel %vm642, %v722, 0.0
    %v753 = vadd.f32 %v751, %v752
    %v754 = vrot.slane %v753, 4
    %v755 = vadd.f32 %v753, %v754
    %v756 = vrot.slane %v755, 2
    %v757 = vadd.f32 %v755, %v756
    %v758 = vrot.slane %v757, 1
    %v759 = vadd.f32 %v757, %v758
    %v760 = vadd.f32 %v759, 0.0
    %v761 = vmul.f32 %v707, %v707
    %v762 = vmul.f32 %v708, %v708
    %v763 = vmul.f32 %v709, %v709
    %v764 = vmul.f32 %v710, %v710
    %v765 = vmul.f32 %v711, %v711
    %v766 = vmul.f32 %v712, %v712
    %v767 = vmul.f32 %v713, %v713
    %v768 = vmul.f32 %v714, %v714
    %v769 = vmul.f32 %v715, %v715
    %v770 = vmul.f32 %v716, %v716
    %v771 = vmul.f32 %v717, %v717
    %v772 = vmul.f32 %v718, %v718
    %v773 = vmul.f32 %v719, %v719
    %v774 = vmul.f32 %v720, %v720
    %v775 = vmul.f32 %v721, %v721
    %v776 = vmul.f32 %v722, %v722
    %v777 = vsel %vm642, %v761, 0.0
    %v778 = vsel %vm642, %v762, 0.0
    %v779 = vadd.f32 %v777, %v778
    %v780 = vsel %vm642, %v763, 0.0
    %v781 = vadd.f32 %v779, %v780
    %v782 = vsel %vm642, %v764, 0.0
    %v783 = vadd.f32 %v781, %v782
    %v784 = vsel %vm642, %v765, 0.0
    %v785 = vadd.f32 %v783, %v784
    %v786 = vsel %vm642, %v766, 0.0
    %v787 = vadd.f32 %v785, %v786
    %v788 = vsel %vm642, %v767, 0.0
    %v789 = vadd.f32 %v787, %v788
    %v790 = vsel %vm642, %v768, 0.0
    %v791 = vadd.f32 %v789, %v790
    %v792 = vsel %vm642, %v769, 0.0
    %v793 = vadd.f32 %v791, %v792
    %v794 = vsel %vm642, %v770, 0.0
    %v795 = vadd.f32 %v793, %v794
    %v796 = vsel %vm642, %v771, 0.0
    %v797 = vadd.f32 %v795, %v796
    %v798 = vsel %vm642, %v772, 0.0
    %v799 = vadd.f32 %v797, %v798
    %v800 = vsel %vm642, %v773, 0.0
    %v801 = vadd.f32 %v799, %v800
    %v802 = vsel %vm642, %v774, 0.0
    %v803 = vadd.f32 %v801, %v802
    %v804 = vsel %vm642, %v775, 0.0
    %v805 = vadd.f32 %v803, %v804
    %v806 = vsel %vm642, %v776, 0.0
    %v807 = vadd.f32 %v805, %v806
    %v808 = vrot.slane %v807, 4
    %v809 = vadd.f32 %v807, %v808
    %v810 = vrot.slane %v809, 2
    %v811 = vadd.f32 %v809, %v810
    %v812 = vrot.slane %v811, 1
    %v813 = vadd.f32 %v811, %v812
    %v814 = vadd.f32 %v813, 0.0
    %s815 = scalar_lea.vmem [#allocation2], 128
    %v816 = vld [vmem:[%s815] sm:$0xff]
    %v817 = vld [vmem:[%s815 + $0x8] sm:$0xff]
    %v818 = vld [vmem:[%s815 + $0x10] sm:$0xff]
    %v819 = vld [vmem:[%s815 + $0x18] sm:$0xff]
    %v820 = vld [vmem:[%s815 + $0x20] sm:$0xff]
    %v821 = vld [vmem:[%s815 + $0x28] sm:$0xff]
    %v822 = vld [vmem:[%s815 + $0x30] sm:$0xff]
    %v823 = vld [vmem:[%s815 + $0x38] sm:$0xff]
    %v824 = vld [vmem:[%s815 + $0x40] sm:$0xff]
    %v825 = vld [vmem:[%s815 + $0x48] sm:$0xff]
    %v826 = vld [vmem:[%s815 + $0x50] sm:$0xff]
    %v827 = vld [vmem:[%s815 + $0x58] sm:$0xff]
    %v828 = vld [vmem:[%s815 + $0x60] sm:$0xff]
    %v829 = vld [vmem:[%s815 + $0x68] sm:$0xff]
    %v830 = vld [vmem:[%s815 + $0x70] sm:$0xff]
    %v831 = vld [vmem:[%s815 + $0x78] sm:$0xff]
    %v832 = vsel %vm642, %v816, 0.0
    %v833 = vsel %vm642, %v817, 0.0
    %v834 = vadd.f32 %v832, %v833
    %v835 = vsel %vm642, %v818, 0.0
    %v836 = vadd.f32 %v834, %v835
    %v837 = vsel %vm642, %v819, 0.0
    %v838 = vadd.f32 %v836, %v837
    %v839 = vsel %vm642, %v820, 0.0
    %v840 = vadd.f32 %v838, %v839
    %v841 = vsel %vm642, %v821, 0.0
    %v842 = vadd.f32 %v840, %v841
    %v843 = vsel %vm642, %v822, 0.0
    %v844 = vadd.f32 %v842, %v843
    %v845 = vsel %vm642, %v823, 0.0
    %v846 = vadd.f32 %v844, %v845
    %v847 = vsel %vm642, %v824, 0.0
    %v848 = vadd.f32 %v846, %v847
    %v849 = vsel %vm642, %v825, 0.0
    %v850 = vadd.f32 %v848, %v849
    %v851 = vsel %vm642, %v826, 0.0
    %v852 = vadd.f32 %v850, %v851
    %v853 = vsel %vm642, %v827, 0.0
    %v854 = vadd.f32 %v852, %v853
    %v855 = vsel %vm642, %v828, 0.0
    %v856 = vadd.f32 %v854, %v855
    %v857 = vsel %vm642, %v829, 0.0
    %v858 = vadd.f32 %v856, %v857
    %v859 = vsel %vm642, %v830, 0.0
    %v860 = vadd.f32 %v858, %v859
    %v861 = vsel %vm642, %v831, 0.0
    %v862 = vadd.f32 %v860, %v861
    %v863 = vrot.slane %v862, 4
    %v864 = vadd.f32 %v862, %v863
    %v865 = vrot.slane %v864, 2
    %v866 = vadd.f32 %v864, %v865
    %v867 = vrot.slane %v866, 1
    %v868 = vadd.f32 %v866, %v867
    %v869 = vadd.f32 %v760, %v868
    %v870 = vmul.f32 %v816, %v816
    %v871 = vmul.f32 %v817, %v817
    %v872 = vmul.f32 %v818, %v818
    %v873 = vmul.f32 %v819, %v819
    %v874 = vmul.f32 %v820, %v820
    %v875 = vmul.f32 %v821, %v821
    %v876 = vmul.f32 %v822, %v822
    %v877 = vmul.f32 %v823, %v823
    %v878 = vmul.f32 %v824, %v824
    %v879 = vmul.f32 %v825, %v825
    %v880 = vmul.f32 %v826, %v826
    %v881 = vmul.f32 %v827, %v827
    %v882 = vmul.f32 %v828, %v828
    %v883 = vmul.f32 %v829, %v829
    %v884 = vmul.f32 %v830, %v830
    %v885 = vmul.f32 %v831, %v831
    %v886 = vsel %vm642, %v870, 0.0
    %v887 = vsel %vm642, %v871, 0.0
    %v888 = vadd.f32 %v886, %v887
    %v889 = vsel %vm642, %v872, 0.0
    %v890 = vadd.f32 %v888, %v889
    %v891 = vsel %vm642, %v873, 0.0
    %v892 = vadd.f32 %v890, %v891
    %v893 = vsel %vm642, %v874, 0.0
    %v894 = vadd.f32 %v892, %v893
    %v895 = vsel %vm642, %v875, 0.0
    %v896 = vadd.f32 %v894, %v895
    %v897 = vsel %vm642, %v876, 0.0
    %v898 = vadd.f32 %v896, %v897
    %v899 = vsel %vm642, %v877, 0.0
    %v900 = vadd.f32 %v898, %v899
    %v901 = vsel %vm642, %v878, 0.0
    %v902 = vadd.f32 %v900, %v901
    %v903 = vsel %vm642, %v879, 0.0
    %v904 = vadd.f32 %v902, %v903
    %v905 = vsel %vm642, %v880, 0.0
    %v906 = vadd.f32 %v904, %v905
    %v907 = vsel %vm642, %v881, 0.0
    %v908 = vadd.f32 %v906, %v907
    %v909 = vsel %vm642, %v882, 0.0
    %v910 = vadd.f32 %v908, %v909
    %v911 = vsel %vm642, %v883, 0.0
    %v912 = vadd.f32 %v910, %v911
    %v913 = vsel %vm642, %v884, 0.0
    %v914 = vadd.f32 %v912, %v913
    %v915 = vsel %vm642, %v885, 0.0
    %v916 = vadd.f32 %v914, %v915
    %v917 = vrot.slane %v916, 4
    %v918 = vadd.f32 %v916, %v917
    %v919 = vrot.slane %v918, 2
    %v920 = vadd.f32 %v918, %v919
    %v921 = vrot.slane %v920, 1
    %v922 = vadd.f32 %v920, %v921
    %v923 = vadd.f32 %v814, %v922
    %s924 = scalar_lea.vmem [#allocation2], 256
    %v925 = vld [vmem:[%s924] sm:$0xff]
    %v926 = vld [vmem:[%s924 + $0x8] sm:$0xff]
    %v927 = vld [vmem:[%s924 + $0x10] sm:$0xff]
    %v928 = vld [vmem:[%s924 + $0x18] sm:$0xff]
    %v929 = vld [vmem:[%s924 + $0x20] sm:$0xff]
    %v930 = vld [vmem:[%s924 + $0x28] sm:$0xff]
    %v931 = vld [vmem:[%s924 + $0x30] sm:$0xff]
    %v932 = vld [vmem:[%s924 + $0x38] sm:$0xff]
    %v933 = vld [vmem:[%s924 + $0x40] sm:$0xff]
    %v934 = vld [vmem:[%s924 + $0x48] sm:$0xff]
    %v935 = vld [vmem:[%s924 + $0x50] sm:$0xff]
    %v936 = vld [vmem:[%s924 + $0x58] sm:$0xff]
    %v937 = vld [vmem:[%s924 + $0x60] sm:$0xff]
    %v938 = vld [vmem:[%s924 + $0x68] sm:$0xff]
    %v939 = vld [vmem:[%s924 + $0x70] sm:$0xff]
    %v940 = vld [vmem:[%s924 + $0x78] sm:$0xff]
    %v941 = vsel %vm642, %v925, 0.0
    %v942 = vsel %vm642, %v926, 0.0
    %v943 = vadd.f32 %v941, %v942
    %v944 = vsel %vm642, %v927, 0.0
    %v945 = vadd.f32 %v943, %v944
    %v946 = vsel %vm642, %v928, 0.0
    %v947 = vadd.f32 %v945, %v946
    %v948 = vsel %vm642, %v929, 0.0
    %v949 = vadd.f32 %v947, %v948
    %v950 = vsel %vm642, %v930, 0.0
    %v951 = vadd.f32 %v949, %v950
    %v952 = vsel %vm642, %v931, 0.0
    %v953 = vadd.f32 %v951, %v952
    %v954 = vsel %vm642, %v932, 0.0
    %v955 = vadd.f32 %v953, %v954
    %v956 = vsel %vm642, %v933, 0.0
    %v957 = vadd.f32 %v955, %v956
    %v958 = vsel %vm642, %v934, 0.0
    %v959 = vadd.f32 %v957, %v958
    %v960 = vsel %vm642, %v935, 0.0
    %v961 = vadd.f32 %v959, %v960
    %v962 = vsel %vm642, %v936, 0.0
    %v963 = vadd.f32 %v961, %v962
    %v964 = vsel %vm642, %v937, 0.0
    %v965 = vadd.f32 %v963, %v964
    %v966 = vsel %vm642, %v938, 0.0
    %v967 = vadd.f32 %v965, %v966
    %v968 = vsel %vm642, %v939, 0.0
    %v969 = vadd.f32 %v967, %v968
    %v970 = vsel %vm642, %v940, 0.0
    %v971 = vadd.f32 %v969, %v970
    %v972 = vrot.slane %v971, 4
    %v973 = vadd.f32 %v971, %v972
    %v974 = vrot.slane %v973, 2
    %v975 = vadd.f32 %v973, %v974
    %v976 = vrot.slane %v975, 1
    %v977 = vadd.f32 %v975, %v976
    %v978 = vadd.f32 %v869, %v977
    %v979 = vmul.f32 %v925, %v925
    %v980 = vmul.f32 %v926, %v926
    %v981 = vmul.f32 %v927, %v927
    %v982 = vmul.f32 %v928, %v928
    %v983 = vmul.f32 %v929, %v929
    %v984 = vmul.f32 %v930, %v930
    %v985 = vmul.f32 %v931, %v931
    %v986 = vmul.f32 %v932, %v932
    %v987 = vmul.f32 %v933, %v933
    %v988 = vmul.f32 %v934, %v934
    %v989 = vmul.f32 %v935, %v935
    %v990 = vmul.f32 %v936, %v936
    %v991 = vmul.f32 %v937, %v937
    %v992 = vmul.f32 %v938, %v938
    %v993 = vmul.f32 %v939, %v939
    %v994 = vmul.f32 %v940, %v940
    %v995 = vsel %vm642, %v979, 0.0
    %v996 = vsel %vm642, %v980, 0.0
    %v997 = vadd.f32 %v995, %v996
    %v998 = vsel %vm642, %v981, 0.0
    %v999 = vadd.f32 %v997, %v998
    %v1000 = vsel %vm642, %v982, 0.0
    %v1001 = vadd.f32 %v999, %v1000
    %v1002 = vsel %vm642, %v983, 0.0
    %v1003 = vadd.f32 %v1001, %v1002
    %v1004 = vsel %vm642, %v984, 0.0
    %v1005 = vadd.f32 %v1003, %v1004
    %v1006 = vsel %vm642, %v985, 0.0
    %v1007 = vadd.f32 %v1005, %v1006
    %v1008 = vsel %vm642, %v986, 0.0
    %v1009 = vadd.f32 %v1007, %v1008
    %v1010 = vsel %vm642, %v987, 0.0
    %v1011 = vadd.f32 %v1009, %v1010
    %v1012 = vsel %vm642, %v988, 0.0
    %v1013 = vadd.f32 %v1011, %v1012
    %v1014 = vsel %vm642, %v989, 0.0
    %v1015 = vadd.f32 %v1013, %v1014
    %v1016 = vsel %vm642, %v990, 0.0
    %v1017 = vadd.f32 %v1015, %v1016
    %v1018 = vsel %vm642, %v991, 0.0
    %v1019 = vadd.f32 %v1017, %v1018
    %v1020 = vsel %vm642, %v992, 0.0
    %v1021 = vadd.f32 %v1019, %v1020
    %v1022 = vsel %vm642, %v993, 0.0
    %v1023 = vadd.f32 %v1021, %v1022
    %v1024 = vsel %vm642, %v994, 0.0
    %v1025 = vadd.f32 %v1023, %v1024
    %v1026 = vrot.slane %v1025, 4
    %v1027 = vadd.f32 %v1025, %v1026
    %v1028 = vrot.slane %v1027, 2
    %v1029 = vadd.f32 %v1027, %v1028
    %v1030 = vrot.slane %v1029, 1
    %v1031 = vadd.f32 %v1029, %v1030
    %v1032 = vadd.f32 %v923, %v1031
    %s1033 = scalar_lea.vmem [#allocation2], 384
    %v1034 = vld [vmem:[%s1033] sm:$0xff]
    %v1035 = vld [vmem:[%s1033 + $0x8] sm:$0xff]
    %v1036 = vld [vmem:[%s1033 + $0x10] sm:$0xff]
    %v1037 = vld [vmem:[%s1033 + $0x18] sm:$0xff]
    %v1038 = vld [vmem:[%s1033 + $0x20] sm:$0xff]
    %v1039 = vld [vmem:[%s1033 + $0x28] sm:$0xff]
    %v1040 = vld [vmem:[%s1033 + $0x30] sm:$0xff]
    %v1041 = vld [vmem:[%s1033 + $0x38] sm:$0xff]
    %v1042 = vld [vmem:[%s1033 + $0x40] sm:$0xff]
    %v1043 = vld [vmem:[%s1033 + $0x48] sm:$0xff]
    %v1044 = vld [vmem:[%s1033 + $0x50] sm:$0xff]
    %v1045 = vld [vmem:[%s1033 + $0x58] sm:$0xff]
    %v1046 = vld [vmem:[%s1033 + $0x60] sm:$0xff]
    %v1047 = vld [vmem:[%s1033 + $0x68] sm:$0xff]
    %v1048 = vld [vmem:[%s1033 + $0x70] sm:$0xff]
    %v1049 = vld [vmem:[%s1033 + $0x78] sm:$0xff]
    %v1050 = vsel %vm642, %v1034, 0.0
    %v1051 = vsel %vm642, %v1035, 0.0
    %v1052 = vadd.f32 %v1050, %v1051
    %v1053 = vsel %vm642, %v1036, 0.0
    %v1054 = vadd.f32 %v1052, %v1053
    %v1055 = vsel %vm642, %v1037, 0.0
    %v1056 = vadd.f32 %v1054, %v1055
    %v1057 = vsel %vm642, %v1038, 0.0
    %v1058 = vadd.f32 %v1056, %v1057
    %v1059 = vsel %vm642, %v1039, 0.0
    %v1060 = vadd.f32 %v1058, %v1059
    %v1061 = vsel %vm642, %v1040, 0.0
    %v1062 = vadd.f32 %v1060, %v1061
    %v1063 = vsel %vm642, %v1041, 0.0
    %v1064 = vadd.f32 %v1062, %v1063
    %v1065 = vsel %vm642, %v1042, 0.0
    %v1066 = vadd.f32 %v1064, %v1065
    %v1067 = vsel %vm642, %v1043, 0.0
    %v1068 = vadd.f32 %v1066, %v1067
    %v1069 = vsel %vm642, %v1044, 0.0
    %v1070 = vadd.f32 %v1068, %v1069
    %v1071 = vsel %vm642, %v1045, 0.0
    %v1072 = vadd.f32 %v1070, %v1071
    %v1073 = vsel %vm642, %v1046, 0.0
    %v1074 = vadd.f32 %v1072, %v1073
    %v1075 = vsel %vm642, %v1047, 0.0
    %v1076 = vadd.f32 %v1074, %v1075
    %v1077 = vsel %vm642, %v1048, 0.0
    %v1078 = vadd.f32 %v1076, %v1077
    %v1079 = vsel %vm642, %v1049, 0.0
    %v1080 = vadd.f32 %v1078, %v1079
    %v1081 = vrot.slane %v1080, 4
    %v1082 = vadd.f32 %v1080, %v1081
    %v1083 = vrot.slane %v1082, 2
    %v1084 = vadd.f32 %v1082, %v1083
    %v1085 = vrot.slane %v1084, 1
    %v1086 = vadd.f32 %v1084, %v1085
    %v1087 = vadd.f32 %v978, %v1086
    %v1088 = vmul.f32 %v1034, %v1034
    %v1089 = vmul.f32 %v1035, %v1035
    %v1090 = vmul.f32 %v1036, %v1036
    %v1091 = vmul.f32 %v1037, %v1037
    %v1092 = vmul.f32 %v1038, %v1038
    %v1093 = vmul.f32 %v1039, %v1039
    %v1094 = vmul.f32 %v1040, %v1040
    %v1095 = vmul.f32 %v1041, %v1041
    %v1096 = vmul.f32 %v1042, %v1042
    %v1097 = vmul.f32 %v1043, %v1043
    %v1098 = vmul.f32 %v1044, %v1044
    %v1099 = vmul.f32 %v1045, %v1045
    %v1100 = vmul.f32 %v1046, %v1046
    %v1101 = vmul.f32 %v1047, %v1047
    %v1102 = vmul.f32 %v1048, %v1048
    %v1103 = vmul.f32 %v1049, %v1049
    %v1104 = vsel %vm642, %v1088, 0.0
    %v1105 = vsel %vm642, %v1089, 0.0
    %v1106 = vadd.f32 %v1104, %v1105
    %v1107 = vsel %vm642, %v1090, 0.0
    %v1108 = vadd.f32 %v1106, %v1107
    %v1109 = vsel %vm642, %v1091, 0.0
    %v1110 = vadd.f32 %v1108, %v1109
    %v1111 = vsel %vm642, %v1092, 0.0
    %v1112 = vadd.f32 %v1110, %v1111
    %v1113 = vsel %vm642, %v1093, 0.0
    %v1114 = vadd.f32 %v1112, %v1113
    %v1115 = vsel %vm642, %v1094, 0.0
    %v1116 = vadd.f32 %v1114, %v1115
    %v1117 = vsel %vm642, %v1095, 0.0
    %v1118 = vadd.f32 %v1116, %v1117
    %v1119 = vsel %vm642, %v1096, 0.0
    %v1120 = vadd.f32 %v1118, %v1119
    %v1121 = vsel %vm642, %v1097, 0.0
    %v1122 = vadd.f32 %v1120, %v1121
    %v1123 = vsel %vm642, %v1098, 0.0
    %v1124 = vadd.f32 %v1122, %v1123
    %v1125 = vsel %vm642, %v1099, 0.0
    %v1126 = vadd.f32 %v1124, %v1125
    %v1127 = vsel %vm642, %v1100, 0.0
    %v1128 = vadd.f32 %v1126, %v1127
    %v1129 = vsel %vm642, %v1101, 0.0
    %v1130 = vadd.f32 %v1128, %v1129
    %v1131 = vsel %vm642, %v1102, 0.0
    %v1132 = vadd.f32 %v1130, %v1131
    %v1133 = vsel %vm642, %v1103, 0.0
    %v1134 = vadd.f32 %v1132, %v1133
    %v1135 = vrot.slane %v1134, 4
    %v1136 = vadd.f32 %v1134, %v1135
    %v1137 = vrot.slane %v1136, 2
    %v1138 = vadd.f32 %v1136, %v1137
    %v1139 = vrot.slane %v1138, 1
    %v1140 = vadd.f32 %v1138, %v1139
    %v1141 = vadd.f32 %v1032, %v1140
    %v1142 = vmul.f32 %v1087, 0.001953125
    %v1143 = vmul.f32 %v1141, 0.001953125
    %v1144 = vmul.f32 %v1142, %v1142
    %v1145 = vsub.f32 %v1143, %v1144
    %v1146 = vadd.f32 %v1145, 1e-05
    %v1147 = vrsqrt.pop %v1146
    %v1148 = vld [vmem:[%s2] sm:$0x1]
    %v1149 = vld [vmem:[%s2 + $0x1] sm:$0x1]
    %v1150 = vmul.f32 %v1147, %v1148
    %v1151 = vmul.f32 %v1142, %v1150
    %v1152 = vsub.f32 %v1149, %v1151
    %v1153 = vlaneseq
    %v1154 = vshrl.u32 %v1153, 7
    %v1155 = vsub.s32 0, %v1154
    %v1156 = vrot.slane %v1150, %v1155
    %v1157 = vmul.f32 %v707, %v1156
    %v1158 = vmul.f32 %v708, %v1156
    %v1159 = vmul.f32 %v709, %v1156
    %v1160 = vmul.f32 %v710, %v1156
    %v1161 = vmul.f32 %v711, %v1156
    %v1162 = vmul.f32 %v712, %v1156
    %v1163 = vmul.f32 %v713, %v1156
    %v1164 = vmul.f32 %v714, %v1156
    %v1165 = vmul.f32 %v715, %v1156
    %v1166 = vmul.f32 %v716, %v1156
    %v1167 = vmul.f32 %v717, %v1156
    %v1168 = vmul.f32 %v718, %v1156
    %v1169 = vmul.f32 %v719, %v1156
    %v1170 = vmul.f32 %v720, %v1156
    %v1171 = vmul.f32 %v721, %v1156
    %v1172 = vmul.f32 %v722, %v1156
    %v1173 = vlaneseq
    %v1174 = vshrl.u32 %v1173, 7
    %v1175 = vsub.s32 0, %v1174
    %v1176 = vrot.slane %v1152, %v1175
    %v1177 = vadd.f32 %v1157, %v1176
    %v1178 = vadd.f32 %v1158, %v1176
    %v1179 = vadd.f32 %v1159, %v1176
    %v1180 = vadd.f32 %v1160, %v1176
    %v1181 = vadd.f32 %v1161, %v1176
    %v1182 = vadd.f32 %v1162, %v1176
    %v1183 = vadd.f32 %v1163, %v1176
    %v1184 = vadd.f32 %v1164, %v1176
    %v1185 = vadd.f32 %v1165, %v1176
    %v1186 = vadd.f32 %v1166, %v1176
    %v1187 = vadd.f32 %v1167, %v1176
    %v1188 = vadd.f32 %v1168, %v1176
    %v1189 = vadd.f32 %v1169, %v1176
    %v1190 = vadd.f32 %v1170, %v1176
    %v1191 = vadd.f32 %v1171, %v1176
    %v1192 = vadd.f32 %v1172, %v1176
    %1193 = vst.msk [vmem:[#allocation2] sm:$0xff] %vm642, %v1177
    %1194 = vst.msk [vmem:[#allocation2 + $0x8] sm:$0xff] %vm642, %v1178
    %1195 = vst.msk [vmem:[#allocation2 + $0x10] sm:$0xff] %vm642, %v1179
    %1196 = vst.msk [vmem:[#allocation2 + $0x18] sm:$0xff] %vm642, %v1180
    %1197 = vst.msk [vmem:[#allocation2 + $0x20] sm:$0xff] %vm642, %v1181
    %1198 = vst.msk [vmem:[#allocation2 + $0x28] sm:$0xff] %vm642, %v1182
    %1199 = vst.msk [vmem:[#allocation2 + $0x30] sm:$0xff] %vm642, %v1183
    %1200 = vst.msk [vmem:[#allocation2 + $0x38] sm:$0xff] %vm642, %v1184
    %1201 = vst.msk [vmem:[#allocation2 + $0x40] sm:$0xff] %vm642, %v1185
    %1202 = vst.msk [vmem:[#allocation2 + $0x48] sm:$0xff] %vm642, %v1186
    %1203 = vst.msk [vmem:[#allocation2 + $0x50] sm:$0xff] %vm642, %v1187
    %1204 = vst.msk [vmem:[#allocation2 + $0x58] sm:$0xff] %vm642, %v1188
    %1205 = vst.msk [vmem:[#allocation2 + $0x60] sm:$0xff] %vm642, %v1189
    %1206 = vst.msk [vmem:[#allocation2 + $0x68] sm:$0xff] %vm642, %v1190
    %1207 = vst.msk [vmem:[#allocation2 + $0x70] sm:$0xff] %vm642, %v1191
    %1208 = vst.msk [vmem:[#allocation2 + $0x78] sm:$0xff] %vm642, %v1192
    %v1209 = vld [vmem:[%s815] sm:$0xff]
    %v1210 = vld [vmem:[%s815 + $0x8] sm:$0xff]
    %v1211 = vld [vmem:[%s815 + $0x10] sm:$0xff]
    %v1212 = vld [vmem:[%s815 + $0x18] sm:$0xff]
    %v1213 = vld [vmem:[%s815 + $0x20] sm:$0xff]
    %v1214 = vld [vmem:[%s815 + $0x28] sm:$0xff]
    %v1215 = vld [vmem:[%s815 + $0x30] sm:$0xff]
    %v1216 = vld [vmem:[%s815 + $0x38] sm:$0xff]
    %v1217 = vld [vmem:[%s815 + $0x40] sm:$0xff]
    %v1218 = vld [vmem:[%s815 + $0x48] sm:$0xff]
    %v1219 = vld [vmem:[%s815 + $0x50] sm:$0xff]
    %v1220 = vld [vmem:[%s815 + $0x58] sm:$0xff]
    %v1221 = vld [vmem:[%s815 + $0x60] sm:$0xff]
    %v1222 = vld [vmem:[%s815 + $0x68] sm:$0xff]
    %v1223 = vld [vmem:[%s815 + $0x70] sm:$0xff]
    %v1224 = vld [vmem:[%s815 + $0x78] sm:$0xff]
    %v1225 = vmul.f32 %v1209, %v1156
    %v1226 = vmul.f32 %v1210, %v1156
    %v1227 = vmul.f32 %v1211, %v1156
    %v1228 = vmul.f32 %v1212, %v1156
    %v1229 = vmul.f32 %v1213, %v1156
    %v1230 = vmul.f32 %v1214, %v1156
    %v1231 = vmul.f32 %v1215, %v1156
    %v1232 = vmul.f32 %v1216, %v1156
    %v1233 = vmul.f32 %v1217, %v1156
    %v1234 = vmul.f32 %v1218, %v1156
    %v1235 = vmul.f32 %v1219, %v1156
    %v1236 = vmul.f32 %v1220, %v1156
    %v1237 = vmul.f32 %v1221, %v1156
    %v1238 = vmul.f32 %v1222, %v1156
    %v1239 = vmul.f32 %v1223, %v1156
    %v1240 = vmul.f32 %v1224, %v1156
    %v1241 = vadd.f32 %v1225, %v1176
    %v1242 = vadd.f32 %v1226, %v1176
    %v1243 = vadd.f32 %v1227, %v1176
    %v1244 = vadd.f32 %v1228, %v1176
    %v1245 = vadd.f32 %v1229, %v1176
    %v1246 = vadd.f32 %v1230, %v1176
    %v1247 = vadd.f32 %v1231, %v1176
    %v1248 = vadd.f32 %v1232, %v1176
    %v1249 = vadd.f32 %v1233, %v1176
    %v1250 = vadd.f32 %v1234, %v1176
    %v1251 = vadd.f32 %v1235, %v1176
    %v1252 = vadd.f32 %v1236, %v1176
    %v1253 = vadd.f32 %v1237, %v1176
    %v1254 = vadd.f32 %v1238, %v1176
    %v1255 = vadd.f32 %v1239, %v1176
    %v1256 = vadd.f32 %v1240, %v1176
    %1257 = vst.msk [vmem:[%s815] sm:$0xff] %vm642, %v1241
    %1258 = vst.msk [vmem:[%s815 + $0x8] sm:$0xff] %vm642, %v1242
    %1259 = vst.msk [vmem:[%s815 + $0x10] sm:$0xff] %vm642, %v1243
    %1260 = vst.msk [vmem:[%s815 + $0x18] sm:$0xff] %vm642, %v1244
    %1261 = vst.msk [vmem:[%s815 + $0x20] sm:$0xff] %vm642, %v1245
    %1262 = vst.msk [vmem:[%s815 + $0x28] sm:$0xff] %vm642, %v1246
    %1263 = vst.msk [vmem:[%s815 + $0x30] sm:$0xff] %vm642, %v1247
    %1264 = vst.msk [vmem:[%s815 + $0x38] sm:$0xff] %vm642, %v1248
    %1265 = vst.msk [vmem:[%s815 + $0x40] sm:$0xff] %vm642, %v1249
    %1266 = vst.msk [vmem:[%s815 + $0x48] sm:$0xff] %vm642, %v1250
    %1267 = vst.msk [vmem:[%s815 + $0x50] sm:$0xff] %vm642, %v1251
    %1268 = vst.msk [vmem:[%s815 + $0x58] sm:$0xff] %vm642, %v1252
    %1269 = vst.msk [vmem:[%s815 + $0x60] sm:$0xff] %vm642, %v1253
    %1270 = vst.msk [vmem:[%s815 + $0x68] sm:$0xff] %vm642, %v1254
    %1271 = vst.msk [vmem:[%s815 + $0x70] sm:$0xff] %vm642, %v1255
    %1272 = vst.msk [vmem:[%s815 + $0x78] sm:$0xff] %vm642, %v1256
    %v1273 = vld [vmem:[%s924] sm:$0xff]
    %v1274 = vld [vmem:[%s924 + $0x8] sm:$0xff]
    %v1275 = vld [vmem:[%s924 + $0x10] sm:$0xff]
    %v1276 = vld [vmem:[%s924 + $0x18] sm:$0xff]
    %v1277 = vld [vmem:[%s924 + $0x20] sm:$0xff]
    %v1278 = vld [vmem:[%s924 + $0x28] sm:$0xff]
    %v1279 = vld [vmem:[%s924 + $0x30] sm:$0xff]
    %v1280 = vld [vmem:[%s924 + $0x38] sm:$0xff]
    %v1281 = vld [vmem:[%s924 + $0x40] sm:$0xff]
    %v1282 = vld [vmem:[%s924 + $0x48] sm:$0xff]
    %v1283 = vld [vmem:[%s924 + $0x50] sm:$0xff]
    %v1284 = vld [vmem:[%s924 + $0x58] sm:$0xff]
    %v1285 = vld [vmem:[%s924 + $0x60] sm:$0xff]
    %v1286 = vld [vmem:[%s924 + $0x68] sm:$0xff]
    %v1287 = vld [vmem:[%s924 + $0x70] sm:$0xff]
    %v1288 = vld [vmem:[%s924 + $0x78] sm:$0xff]
    %v1289 = vmul.f32 %v1273, %v1156
    %v1290 = vmul.f32 %v1274, %v1156
    %v1291 = vmul.f32 %v1275, %v1156
    %v1292 = vmul.f32 %v1276, %v1156
    %v1293 = vmul.f32 %v1277, %v1156
    %v1294 = vmul.f32 %v1278, %v1156
    %v1295 = vmul.f32 %v1279, %v1156
    %v1296 = vmul.f32 %v1280, %v1156
    %v1297 = vmul.f32 %v1281, %v1156
    %v1298 = vmul.f32 %v1282, %v1156
    %v1299 = vmul.f32 %v1283, %v1156
    %v1300 = vmul.f32 %v1284, %v1156
    %v1301 = vmul.f32 %v1285, %v1156
    %v1302 = vmul.f32 %v1286, %v1156
    %v1303 = vmul.f32 %v1287, %v1156
    %v1304 = vmul.f32 %v1288, %v1156
    %v1305 = vadd.f32 %v1289, %v1176
    %v1306 = vadd.f32 %v1290, %v1176
    %v1307 = vadd.f32 %v1291, %v1176
    %v1308 = vadd.f32 %v1292, %v1176
    %v1309 = vadd.f32 %v1293, %v1176
    %v1310 = vadd.f32 %v1294, %v1176
    %v1311 = vadd.f32 %v1295, %v1176
    %v1312 = vadd.f32 %v1296, %v1176
    %v1313 = vadd.f32 %v1297, %v1176
    %v1314 = vadd.f32 %v1298, %v1176
    %v1315 = vadd.f32 %v1299, %v1176
    %v1316 = vadd.f32 %v1300, %v1176
    %v1317 = vadd.f32 %v1301, %v1176
    %v1318 = vadd.f32 %v1302, %v1176
    %v1319 = vadd.f32 %v1303, %v1176
    %v1320 = vadd.f32 %v1304, %v1176
    %1321 = vst.msk [vmem:[%s924] sm:$0xff] %vm642, %v1305
    %1322 = vst.msk [vmem:[%s924 + $0x8] sm:$0xff] %vm642, %v1306
    %1323 = vst.msk [vmem:[%s924 + $0x10] sm:$0xff] %vm642, %v1307
    %1324 = vst.msk [vmem:[%s924 + $0x18] sm:$0xff] %vm642, %v1308
    %1325 = vst.msk [vmem:[%s924 + $0x20] sm:$0xff] %vm642, %v1309
    %1326 = vst.msk [vmem:[%s924 + $0x28] sm:$0xff] %vm642, %v1310
    %1327 = vst.msk [vmem:[%s924 + $0x30] sm:$0xff] %vm642, %v1311
    %1328 = vst.msk [vmem:[%s924 + $0x38] sm:$0xff] %vm642, %v1312
    %1329 = vst.msk [vmem:[%s924 + $0x40] sm:$0xff] %vm642, %v1313
    %1330 = vst.msk [vmem:[%s924 + $0x48] sm:$0xff] %vm642, %v1314
    %1331 = vst.msk [vmem:[%s924 + $0x50] sm:$0xff] %vm642, %v1315
    %1332 = vst.msk [vmem:[%s924 + $0x58] sm:$0xff] %vm642, %v1316
    %1333 = vst.msk [vmem:[%s924 + $0x60] sm:$0xff] %vm642, %v1317
    %1334 = vst.msk [vmem:[%s924 + $0x68] sm:$0xff] %vm642, %v1318
    %1335 = vst.msk [vmem:[%s924 + $0x70] sm:$0xff] %vm642, %v1319
    %1336 = vst.msk [vmem:[%s924 + $0x78] sm:$0xff] %vm642, %v1320
    %v1337 = vld [vmem:[%s1033] sm:$0xff]
    %v1338 = vld [vmem:[%s1033 + $0x8] sm:$0xff]
    %v1339 = vld [vmem:[%s1033 + $0x10] sm:$0xff]
    %v1340 = vld [vmem:[%s1033 + $0x18] sm:$0xff]
    %v1341 = vld [vmem:[%s1033 + $0x20] sm:$0xff]
    %v1342 = vld [vmem:[%s1033 + $0x28] sm:$0xff]
    %v1343 = vld [vmem:[%s1033 + $0x30] sm:$0xff]
    %v1344 = vld [vmem:[%s1033 + $0x38] sm:$0xff]
    %v1345 = vld [vmem:[%s1033 + $0x40] sm:$0xff]
    %v1346 = vld [vmem:[%s1033 + $0x48] sm:$0xff]
    %v1347 = vld [vmem:[%s1033 + $0x50] sm:$0xff]
    %v1348 = vld [vmem:[%s1033 + $0x58] sm:$0xff]
    %v1349 = vld [vmem:[%s1033 + $0x60] sm:$0xff]
    %v1350 = vld [vmem:[%s1033 + $0x68] sm:$0xff]
    %v1351 = vld [vmem:[%s1033 + $0x70] sm:$0xff]
    %v1352 = vld [vmem:[%s1033 + $0x78] sm:$0xff]
    %v1353 = vmul.f32 %v1337, %v1156
    %v1354 = vmul.f32 %v1338, %v1156
    %v1355 = vmul.f32 %v1339, %v1156
    %v1356 = vmul.f32 %v1340, %v1156
    %v1357 = vmul.f32 %v1341, %v1156
    %v1358 = vmul.f32 %v1342, %v1156
    %v1359 = vmul.f32 %v1343, %v1156
    %v1360 = vmul.f32 %v1344, %v1156
    %v1361 = vmul.f32 %v1345, %v1156
    %v1362 = vmul.f32 %v1346, %v1156
    %v1363 = vmul.f32 %v1347, %v1156
    %v1364 = vmul.f32 %v1348, %v1156
    %v1365 = vmul.f32 %v1349, %v1156
    %v1366 = vmul.f32 %v1350, %v1156
    %v1367 = vmul.f32 %v1351, %v1156
    %v1368 = vmul.f32 %v1352, %v1156
    %v1369 = vadd.f32 %v1353, %v1176
    %v1370 = vadd.f32 %v1354, %v1176
    %v1371 = vadd.f32 %v1355, %v1176
    %v1372 = vadd.f32 %v1356, %v1176
    %v1373 = vadd.f32 %v1357, %v1176
    %v1374 = vadd.f32 %v1358, %v1176
    %v1375 = vadd.f32 %v1359, %v1176
    %v1376 = vadd.f32 %v1360, %v1176
    %v1377 = vadd.f32 %v1361, %v1176
    %v1378 = vadd.f32 %v1362, %v1176
    %v1379 = vadd.f32 %v1363, %v1176
    %v1380 = vadd.f32 %v1364, %v1176
    %v1381 = vadd.f32 %v1365, %v1176
    %v1382 = vadd.f32 %v1366, %v1176
    %v1383 = vadd.f32 %v1367, %v1176
    %v1384 = vadd.f32 %v1368, %v1176
    %1385 = vst.msk [vmem:[%s1033] sm:$0xff] %vm642, %v1369
    %1386 = vst.msk [vmem:[%s1033 + $0x8] sm:$0xff] %vm642, %v1370
    %1387 = vst.msk [vmem:[%s1033 + $0x10] sm:$0xff] %vm642, %v1371
    %1388 = vst.msk [vmem:[%s1033 + $0x18] sm:$0xff] %vm642, %v1372
    %1389 = vst.msk [vmem:[%s1033 + $0x20] sm:$0xff] %vm642, %v1373
    %1390 = vst.msk [vmem:[%s1033 + $0x28] sm:$0xff] %vm642, %v1374
    %1391 = vst.msk [vmem:[%s1033 + $0x30] sm:$0xff] %vm642, %v1375
    %1392 = vst.msk [vmem:[%s1033 + $0x38] sm:$0xff] %vm642, %v1376
    %1393 = vst.msk [vmem:[%s1033 + $0x40] sm:$0xff] %vm642, %v1377
    %1394 = vst.msk [vmem:[%s1033 + $0x48] sm:$0xff] %vm642, %v1378
    %1395 = vst.msk [vmem:[%s1033 + $0x50] sm:$0xff] %vm642, %v1379
    %1396 = vst.msk [vmem:[%s1033 + $0x58] sm:$0xff] %vm642, %v1380
    %1397 = vst.msk [vmem:[%s1033 + $0x60] sm:$0xff] %vm642, %v1381
    %1398 = vst.msk [vmem:[%s1033 + $0x68] sm:$0xff] %vm642, %v1382
    %1399 = vst.msk [vmem:[%s1033 + $0x70] sm:$0xff] %vm642, %v1383
    %1400 = vst.msk [vmem:[%s1033 + $0x78] sm:$0xff] %vm642, %v1384
    // Predicated region
    $region14: #{conv_batchnorm2d.1} parent=1 // pred_check
      _
    $region15: #{conv_batchnorm2d.1} parent=1 // pred_check_branch
      %1402 = sbr.rel (0) target = $region17
    $region16: #{conv_batchnorm2d.1} parent=1 // pred_region
      %s1404 = ssub.s32 8192, 8192
      %1405 = vsyncadd [#allocation3], %s1404
      %s1406 = sshll.u32 [#allocation2], 4
      %s1407 = int_to_ptr.vmem [resolvable:$true] %s1406
      %1412 = dma.vmem_to_hbm [thread:$0]  %s1407, 8192, %s3, [#allocation3], 128, 128, 8
    $region17: #{conv_batchnorm2d.1} parent=1 // pred_fallthru
      _
    // Predicated region
    $region18: #{conv_batchnorm2d.1} parent=1 // pred_check
      _
    $region19: #{conv_batchnorm2d.1} parent=1 // pred_check_branch
      %1414 = sbr.rel (0) target = $region21
    $region20: #{conv_batchnorm2d.1} parent=1 // pred_region
      %1415 = dma.done [#allocation3], 8192
    $region21: #{conv_batchnorm2d.1} parent=1 // pred_fallthru
      _
    %1416 = vsyncpa [#allocation3], 1

</llo_original>
